<compile_context>
chip_gen: v7x
topology: tpu7x:2x2x1
jax: 0.10.0
libtpu: 0.0.40
codegen_flags: <defaults>
</compile_context>

<pallas_src>
import math
import functools

import jax
import jax.numpy as jnp
from jax.experimental import pallas as pl
from jax.experimental.pallas import tpu as pltpu


def encoder_layer_kernel(x_ref,
                         wq_ref, wk_ref, wv_ref, wo_ref, bo_ref,
                         g1_ref, be1_ref, w1_ref, b1_ref, w2_ref, b2_ref,
                         g2_ref, be2_ref,
                         out_ref,
                         k_scratch, v_scratch,
                         *, n_heads, eps, q_tile, mxu_dtype):
    f32 = jnp.float32
    H = n_heads
    S, D = x_ref.shape[1], x_ref.shape[2]
    TQ = q_tile
    d_k = D // H
    qi = pl.program_id(1)

    def mx(a):  # cast activations to the MXU dtype (weights are pre-cast on the host)
        return a if mxu_dtype is None else a.astype(mxu_dtype)

    # ---- K / V for the whole sequence: computed once per batch element (qi == 0),
    # stored head-major (H, S, d_k) in VMEM scratch in the MXU dtype, and reused by
    # every query tile.  Static head loop -> leading-dim indexing only (no lane slicing).
    @pl.when(qi == 0)
    def _fill_kv():
        xf = mx(x_ref[0])                                              # (S, D)
        for h in range(H):
            k_scratch[h] = jnp.dot(xf, wk_ref[h],
                                   preferred_element_type=f32).astype(k_scratch.dtype)
            v_scratch[h] = jnp.dot(xf, wv_ref[h],
                                   preferred_element_type=f32).astype(v_scratch.dtype)
        # TODO(synk): fuse wk/wv into a single (H, D, 2*d_k) operand for a lane-dense
        # fill (N = 2*d_k); kept separate to avoid lane-splitting K/V downstream.

    # ---- Query tile: sliced from the resident full-sequence block (x is DMA'd from HBM
    # only once per batch element; no duplicated per-tile x input).
    start = pl.multiple_of(qi * TQ, TQ)
    xt = x_ref[0, pl.ds(start, TQ), :]                                 # (TQ, D)
    xt_m = mx(xt)

    # ---- Attention, one head at a time.  Peak live intermediate is a single (TQ, S)
    # score block; the head merge is fused into the output projection by accumulating
    # ctx_h @ wo[h] into a (TQ, D) f32 accumulator.  1/sqrt(d_k) is folded into wq.
    attn = jnp.zeros((TQ, D), f32)
    for h in range(H):  # static unroll; H is small
        q_h = jnp.dot(xt_m, wq_ref[h], preferred_element_type=f32)     # (TQ, d_k)
        s_h = jax.lax.dot_general(mx(q_h), k_scratch[h],
                                  (((1,), (1,)), ((), ())),
                                  preferred_element_type=f32)          # (TQ, S)
        s_h = s_h - jnp.max(s_h, axis=-1, keepdims=True)
        e_h = jnp.exp(s_h)
        p_h = e_h * pl.reciprocal(jnp.sum(e_h, axis=-1, keepdims=True),
                                  approx=True)                         # EUP reciprocal
        ctx_h = jnp.dot(mx(p_h), v_scratch[h],
                        preferred_element_type=f32)                    # (TQ, d_k)
        attn = attn + jnp.dot(mx(ctx_h), wo_ref[h],
                              preferred_element_type=f32)              # (TQ, D)
    attn = attn + bo_ref[...]

    # ---- LayerNorm (biased variance), single fused reduction: var = E[x^2] - mean^2.
    def layer_norm(z, gamma, beta):
        mean = jnp.mean(z, axis=-1, keepdims=True)
        meansq = jnp.mean(z * z, axis=-1, keepdims=True)
        inv = jax.lax.rsqrt(meansq - mean * mean + eps)
        return gamma * ((z - mean) * inv) + beta

    # ---- Add & Norm 1 (f32 elementwise math; dropout is eval-mode identity).
    y1 = layer_norm(xt.astype(f32) + attn, g1_ref[...], be1_ref[...])

    # ---- Feed forward: relu(y1 @ W1 + b1) @ W2 + b2.
    hdn = jnp.maximum(
        jnp.dot(mx(y1), w1_ref[...], preferred_element_type=f32) + b1_ref[...], 0.0)
    ff = jnp.dot(mx(hdn), w2_ref[...], preferred_element_type=f32) + b2_ref[...]

    # ---- Add & Norm 2.
    y2 = layer_norm(y1 + ff, g2_ref[...], be2_ref[...])
    out_ref[0] = y2.astype(out_ref.dtype)


def encoder_layer(x, params, *, n_heads, eps=1e-6, q_tile=None, mxu_dtype=jnp.bfloat16):
    B, S, D = x.shape
    assert D % n_heads == 0
    d_k = D // n_heads
    d_ff = params["w1"].shape[1]

    # Query-tile size: whole sequence for short S, otherwise the largest tile in the list
    # dividing S.  256 amortizes per-grid-step overhead on v6e (128 MiB VMEM); pass
    # q_tile=128 explicitly if the 64 MiB v7x budget binds for very long sequences.
    if q_tile is None:
        q_tile = S if S <= 256 else next(
            (t for t in (256, 128, 64, 32, 16, 8) if S % t == 0), S)
    assert S % q_tile == 0
    nq = S // q_tile

    # Host-side layout & dtype prep: per-head weight split, 1/sqrt(d_k) folded into wq,
    # matmul weights cast to the MXU dtype (halves weight VMEM/HBM traffic and removes
    # per-step in-kernel weight casts from the VALU).
    wdt = x.dtype if mxu_dtype is None else jnp.dtype(mxu_dtype)
    kv_dtype = jnp.float32 if mxu_dtype is None else jnp.dtype(mxu_dtype)
    scale = 1.0 / math.sqrt(d_k)
    wq_s = (params["wq"].reshape(D, n_heads, d_k).transpose(1, 0, 2) * scale).astype(wdt)
    wk_s = params["wk"].reshape(D, n_heads, d_k).transpose(1, 0, 2).astype(wdt)
    wv_s = params["wv"].reshape(D, n_heads, d_k).transpose(1, 0, 2).astype(wdt)
    wo_s = params["wo"].reshape(n_heads, d_k, D).astype(wdt)
    w1_c = params["w1"].astype(wdt)
    w2_c = params["w2"].astype(wdt)

    operands = (x, wq_s, wk_s, wv_s, wo_s, params["bo"],
                params["g1"], params["be1"], w1_c, params["b1"],
                w2_c, params["b2"], params["g2"], params["be2"])

    def rep(shape):  # grid-invariant (replicated) operand
        n = len(shape)
        return pl.BlockSpec(shape, lambda b, qi, _n=n: (0,) * _n)
    # TODO(synk): single-buffer the invariant operands (pipeline_mode=pl.Buffered(1))
    # once confirmed on the target jax version; constant index_maps already avoid
    # re-fetching them across grid steps.

    in_specs = [
        pl.BlockSpec((1, S, D), lambda b, qi: (b, 0, 0)),          # x: full sequence per batch
        rep((n_heads, D, d_k)), rep((n_heads, D, d_k)), rep((n_heads, D, d_k)),  # wq, wk, wv
        rep((n_heads, d_k, D)), rep((1, D)),                       # wo, bo
        rep((1, D)), rep((1, D)),                                  # gamma1, beta1
        rep((D, d_ff)), rep((1, d_ff)),                            # w1, b1
        rep((d_ff, D)), rep((1, D)),                               # w2, b2
        rep((1, D)), rep((1, D)),                                  # gamma2, beta2
    ]

    # VMEM budget: double-buffered operand blocks + K/V scratch + per-tile f32 working
    # set with headroom, clamped to the physical per-core VMEM (64 MiB on v7x, 128 MiB
    # on v5e/v6e) minus slack -- never request more than the hardware has.
    def nbytes(a):
        return int(a.size) * jnp.dtype(a.dtype).itemsize
    itemsize = jnp.dtype(x.dtype).itemsize
    weight_bytes = sum(nbytes(a) for a in operands[1:])
    block_bytes = (S * D + q_tile * D) * itemsize
    scratch_bytes = 2 * n_heads * S * d_k * jnp.dtype(kv_dtype).itemsize
    work_bytes = 4 * q_tile * (S + 4 * D + d_ff)
    need = 2 * (weight_bytes + block_bytes) + scratch_bytes + work_bytes
    try:
        vmem_cap = int(pltpu.get_tpu_info().vmem_capacity_bytes)
    except Exception:
        vmem_cap = 64 << 20
    vmem_limit = int(min(max(2 * need + (8 << 20), 32 << 20), vmem_cap - (8 << 20)))

    flops = B * (8 * S * D * D + 4 * S * S * D + 4 * S * D * d_ff)
    cost = pl.CostEstimate(
        flops=int(flops),
        transcendentals=int(B * n_heads * S * S),
        bytes_accessed=int(weight_bytes + 2 * B * S * D * itemsize),
    )

    kernel = functools.partial(encoder_layer_kernel, n_heads=n_heads, eps=eps,
                               q_tile=q_tile, mxu_dtype=mxu_dtype)
    # TODO(synk): on v7x with B < 2 only one TensorCore is fed (batch is the only
    # "parallel" axis); splitting the q-tile axis across cores would need the K/V fill
    # hoisted into its own pallas_call.
    return pl.pallas_call(
        kernel,
        out_shape=jax.ShapeDtypeStruct((B, S, D), x.dtype),
        grid=(B, nq),
        in_specs=in_specs,
        out_specs=pl.BlockSpec((1, q_tile, D), lambda b, qi: (b, qi, 0)),
        scratch_shapes=[
            pltpu.VMEM((n_heads, S, d_k), kv_dtype),   # K, head-major, MXU dtype
            pltpu.VMEM((n_heads, S, d_k), kv_dtype),   # V, head-major, MXU dtype
        ],
        compiler_params=pltpu.CompilerParams(
            dimension_semantics=("parallel", "arbitrary"),
            vmem_limit_bytes=vmem_limit,
        ),
        cost_estimate=cost,
    )(*operands)


# ---------------- pure-JAX reference (mirrors the PyTorch forward, eval mode) ----------------
def reference_encoder_layer(x, p, n_heads, eps=1e-6):
    B, S, D = x.shape
    d_k = D // n_heads

    def ln(z, g, b):
        m = jnp.mean(z, axis=-1, keepdims=True)
        v = jnp.mean((z - m) ** 2, axis=-1, keepdims=True)
        return g * ((z - m) / jnp.sqrt(v + eps)) + b

    q = x @ p["wq"]
    k = x @ p["wk"]
    v = x @ p["wv"]
    q = q.reshape(B, S, n_heads, d_k).transpose(0, 2, 1, 3)
    k = k.reshape(B, S, n_heads, d_k).transpose(0, 2, 1, 3)
    v = v.reshape(B, S, n_heads, d_k).transpose(0, 2, 1, 3)
    scores = jnp.einsum("bhqd,bhkd->bhqk", q, k) / math.sqrt(d_k)
    aw = jax.nn.softmax(scores, axis=-1)
    attn = jnp.einsum("bhqk,bhkd->bhqd", aw, v)
    attn = attn.transpose(0, 2, 1, 3).reshape(B, S, D)
    attn = attn @ p["wo"] + p["bo"]
    y1 = ln(x + attn, p["g1"], p["be1"])
    h = jax.nn.relu(y1 @ p["w1"] + p["b1"])
    ff = h @ p["w2"] + p["b2"]
    return ln(y1 + ff, p["g2"], p["be2"])


if __name__ == "__main__":
    B, S, D, H, F = 2, 8, 32, 4, 64

    key = jax.random.PRNGKey(0)
    ks = jax.random.split(key, 10)

    def xavier(k, shape):
        fan_in, fan_out = shape
        bound = math.sqrt(6.0 / (fan_in + fan_out))
        return jax.random.uniform(k, shape, jnp.float32, -bound, bound)

    def bias(k, fan_in, n):
        bound = 1.0 / math.sqrt(fan_in)
        return jax.random.uniform(k, (1, n), jnp.float32, -bound, bound)

    params = dict(
        wq=xavier(ks[0], (D, D)),
        wk=xavier(ks[1], (D, D)),
        wv=xavier(ks[2], (D, D)),
        wo=xavier(ks[3], (D, D)),
        bo=bias(ks[4], D, D),
        g1=jnp.ones((1, D), jnp.float32),
        be1=jnp.zeros((1, D), jnp.float32),
        w1=xavier(ks[5], (D, F)),
        b1=bias(ks[6], D, F),
        w2=xavier(ks[7], (F, D)),
        b2=bias(ks[8], F, D),
        g2=jnp.ones((1, D), jnp.float32),
        be2=jnp.zeros((1, D), jnp.float32),
    )

    x = jax.random.normal(ks[9], (B, S, D), jnp.float32)

    out = encoder_layer(x, params, n_heads=H)   # bf16 MXU operands, f32 accumulation
    jax.block_until_ready(out)

    ref = reference_encoder_layer(x, params, H)
    assert out.shape == (B, S, D)
    err = float(jnp.max(jnp.abs(out - ref)))
    # bf16 MXU inputs (f32 accumulation) -> bf16-level tolerance vs the f32 reference.
    assert jnp.allclose(out, ref, atol=3e-2, rtol=3e-2), f"max abs err = {err}"

    print("KERNEL_OK")
</pallas_src>

<mosaic_0001>
module attributes {stable_mosaic.version = 11 : i64} {
  func.func @encoder_layer_kernel(%arg0: i32, %arg1: i32, %arg2: memref<1x8x32xf32, #tpu.memory_space<vmem>>, %arg3: memref<4x32x8xbf16, #tpu.memory_space<vmem>>, %arg4: memref<4x32x8xbf16, #tpu.memory_space<vmem>>, %arg5: memref<4x32x8xbf16, #tpu.memory_space<vmem>>, %arg6: memref<4x8x32xbf16, #tpu.memory_space<vmem>>, %arg7: memref<1x32xf32, #tpu.memory_space<vmem>>, %arg8: memref<1x32xf32, #tpu.memory_space<vmem>>, %arg9: memref<1x32xf32, #tpu.memory_space<vmem>>, %arg10: memref<32x64xbf16, #tpu.memory_space<vmem>>, %arg11: memref<1x64xf32, #tpu.memory_space<vmem>>, %arg12: memref<64x32xbf16, #tpu.memory_space<vmem>>, %arg13: memref<1x32xf32, #tpu.memory_space<vmem>>, %arg14: memref<1x32xf32, #tpu.memory_space<vmem>>, %arg15: memref<1x32xf32, #tpu.memory_space<vmem>>, %arg16: memref<1x8x32xf32, #tpu.memory_space<vmem>>, %arg17: memref<4x8x8xbf16, #tpu.memory_space<vmem>>, %arg18: memref<4x8x8xbf16, #tpu.memory_space<vmem>>) attributes {dimension_semantics = [#tpu.dimension_semantics<parallel>, #tpu.dimension_semantics<arbitrary>], iteration_bounds = array<i64: 2, 1>, scalar_prefetch = 0 : i64, scratch_operands = 2 : i64, tpu.core_type = #tpu.core_type<tc>, window_params = [{transform_indices = @transform_0, window_bounds = array<i64: 1, 8, 32>}, {pipeline_mode = #tpu.pipeline_mode<synchronous>, transform_indices = @transform_1, window_bounds = array<i64: 4, 32, 8>}, {pipeline_mode = #tpu.pipeline_mode<synchronous>, transform_indices = @transform_2, window_bounds = array<i64: 4, 32, 8>}, {pipeline_mode = #tpu.pipeline_mode<synchronous>, transform_indices = @transform_3, window_bounds = array<i64: 4, 32, 8>}, {pipeline_mode = #tpu.pipeline_mode<synchronous>, transform_indices = @transform_4, window_bounds = array<i64: 4, 8, 32>}, {pipeline_mode = #tpu.pipeline_mode<synchronous>, transform_indices = @transform_5, window_bounds = array<i64: 1, 32>}, {pipeline_mode = #tpu.pipeline_mode<synchronous>, transform_indices = @transform_6, window_bounds = array<i64: 1, 32>}, {pipeline_mode = #tpu.pipeline_mode<synchronous>, transform_indices = @transform_7, window_bounds = array<i64: 1, 32>}, {pipeline_mode = #tpu.pipeline_mode<synchronous>, transform_indices = @transform_8, window_bounds = array<i64: 32, 64>}, {pipeline_mode = #tpu.pipeline_mode<synchronous>, transform_indices = @transform_9, window_bounds = array<i64: 1, 64>}, {pipeline_mode = #tpu.pipeline_mode<synchronous>, transform_indices = @transform_10, window_bounds = array<i64: 64, 32>}, {pipeline_mode = #tpu.pipeline_mode<synchronous>, transform_indices = @transform_11, window_bounds = array<i64: 1, 32>}, {pipeline_mode = #tpu.pipeline_mode<synchronous>, transform_indices = @transform_12, window_bounds = array<i64: 1, 32>}, {pipeline_mode = #tpu.pipeline_mode<synchronous>, transform_indices = @transform_13, window_bounds = array<i64: 1, 32>}, {transform_indices = @transform_14, window_bounds = array<i64: 1, 8, 32>}]} {
    %c0_i32 = arith.constant 0 : i32
    %0 = arith.cmpi eq, %arg1, %c0_i32 : i32
    %1 = arith.extui %0 : i1 to i32
    %c0_i32_0 = arith.constant 0 : i32
    %2 = arith.cmpi ne, %1, %c0_i32_0 : i32
    scf.if %2 {
      %c0_105 = arith.constant 0 : index
      %c0_106 = arith.constant 0 : index
      %c0_107 = arith.constant 0 : index
      %184 = vector.load %arg2[%c0_105, %c0_106, %c0_107] : memref<1x8x32xf32, #tpu.memory_space<vmem>>, vector<1x8x32xf32>
      %185 = vector.shape_cast %184 : vector<1x8x32xf32> to vector<8x32xf32>
      %186 = arith.truncf %185 : vector<8x32xf32> to vector<8x32xbf16>
      %c0_108 = arith.constant 0 : index
      %c0_109 = arith.constant 0 : index
      %c0_110 = arith.constant 0 : index
      %187 = vector.load %arg4[%c0_108, %c0_109, %c0_110] : memref<4x32x8xbf16, #tpu.memory_space<vmem>>, vector<1x32x8xbf16>
      %188 = vector.shape_cast %187 : vector<1x32x8xbf16> to vector<32x8xbf16>
      %cst_111 = arith.constant dense<0.000000e+00> : vector<8x8xf32>
      %189 = tpu.matmul %186, %188, %cst_111 {dimension_numbers = #tpu.dot_dimension_numbers<[1], [0], [0], [1], [0, 0, 1, 1], [], []>} : vector<8x32xbf16>, vector<32x8xbf16>, vector<8x8xf32> -> vector<8x8xf32>
      %190 = arith.truncf %189 : vector<8x8xf32> to vector<8x8xbf16>
      %c0_112 = arith.constant 0 : index
      %c0_113 = arith.constant 0 : index
      %c0_114 = arith.constant 0 : index
      %191 = vector.load %arg17[%c0_112, %c0_113, %c0_114] : memref<4x8x8xbf16, #tpu.memory_space<vmem>>, vector<1x8x8xbf16>
      %192 = vector.shape_cast %191 : vector<1x8x8xbf16> to vector<8x8xbf16>
      %193 = vector.shape_cast %190 : vector<8x8xbf16> to vector<1x8x8xbf16>
      tpu.vector_store %arg17[%c0_112, %c0_113, %c0_114], %193 {strides = array<i32>} : memref<4x8x8xbf16, #tpu.memory_space<vmem>>, vector<1x8x8xbf16>,
      %c0_115 = arith.constant 0 : index
      %c0_116 = arith.constant 0 : index
      %c0_117 = arith.constant 0 : index
      %194 = vector.load %arg5[%c0_115, %c0_116, %c0_117] : memref<4x32x8xbf16, #tpu.memory_space<vmem>>, vector<1x32x8xbf16>
      %195 = vector.shape_cast %194 : vector<1x32x8xbf16> to vector<32x8xbf16>
      %cst_118 = arith.constant dense<0.000000e+00> : vector<8x8xf32>
      %196 = tpu.matmul %186, %195, %cst_118 {dimension_numbers = #tpu.dot_dimension_numbers<[1], [0], [0], [1], [0, 0, 1, 1], [], []>} : vector<8x32xbf16>, vector<32x8xbf16>, vector<8x8xf32> -> vector<8x8xf32>
      %197 = arith.truncf %196 : vector<8x8xf32> to vector<8x8xbf16>
      %c0_119 = arith.constant 0 : index
      %c0_120 = arith.constant 0 : index
      %c0_121 = arith.constant 0 : index
      %198 = vector.load %arg18[%c0_119, %c0_120, %c0_121] : memref<4x8x8xbf16, #tpu.memory_space<vmem>>, vector<1x8x8xbf16>
      %199 = vector.shape_cast %198 : vector<1x8x8xbf16> to vector<8x8xbf16>
      %200 = vector.shape_cast %197 : vector<8x8xbf16> to vector<1x8x8xbf16>
      tpu.vector_store %arg18[%c0_119, %c0_120, %c0_121], %200 {strides = array<i32>} : memref<4x8x8xbf16, #tpu.memory_space<vmem>>, vector<1x8x8xbf16>,
      %c1_122 = arith.constant 1 : index
      %c0_123 = arith.constant 0 : index
      %c0_124 = arith.constant 0 : index
      %201 = vector.load %arg4[%c1_122, %c0_123, %c0_124] : memref<4x32x8xbf16, #tpu.memory_space<vmem>>, vector<1x32x8xbf16>
      %202 = vector.shape_cast %201 : vector<1x32x8xbf16> to vector<32x8xbf16>
      %cst_125 = arith.constant dense<0.000000e+00> : vector<8x8xf32>
      %203 = tpu.matmul %186, %202, %cst_125 {dimension_numbers = #tpu.dot_dimension_numbers<[1], [0], [0], [1], [0, 0, 1, 1], [], []>} : vector<8x32xbf16>, vector<32x8xbf16>, vector<8x8xf32> -> vector<8x8xf32>
      %204 = arith.truncf %203 : vector<8x8xf32> to vector<8x8xbf16>
      %c1_126 = arith.constant 1 : index
      %c0_127 = arith.constant 0 : index
      %c0_128 = arith.constant 0 : index
      %205 = vector.load %arg17[%c1_126, %c0_127, %c0_128] : memref<4x8x8xbf16, #tpu.memory_space<vmem>>, vector<1x8x8xbf16>
      %206 = vector.shape_cast %205 : vector<1x8x8xbf16> to vector<8x8xbf16>
      %207 = vector.shape_cast %204 : vector<8x8xbf16> to vector<1x8x8xbf16>
      tpu.vector_store %arg17[%c1_126, %c0_127, %c0_128], %207 {strides = array<i32>} : memref<4x8x8xbf16, #tpu.memory_space<vmem>>, vector<1x8x8xbf16>,
      %c1_129 = arith.constant 1 : index
      %c0_130 = arith.constant 0 : index
      %c0_131 = arith.constant 0 : index
      %208 = vector.load %arg5[%c1_129, %c0_130, %c0_131] : memref<4x32x8xbf16, #tpu.memory_space<vmem>>, vector<1x32x8xbf16>
      %209 = vector.shape_cast %208 : vector<1x32x8xbf16> to vector<32x8xbf16>
      %cst_132 = arith.constant dense<0.000000e+00> : vector<8x8xf32>
      %210 = tpu.matmul %186, %209, %cst_132 {dimension_numbers = #tpu.dot_dimension_numbers<[1], [0], [0], [1], [0, 0, 1, 1], [], []>} : vector<8x32xbf16>, vector<32x8xbf16>, vector<8x8xf32> -> vector<8x8xf32>
      %211 = arith.truncf %210 : vector<8x8xf32> to vector<8x8xbf16>
      %c1_133 = arith.constant 1 : index
      %c0_134 = arith.constant 0 : index
      %c0_135 = arith.constant 0 : index
      %212 = vector.load %arg18[%c1_133, %c0_134, %c0_135] : memref<4x8x8xbf16, #tpu.memory_space<vmem>>, vector<1x8x8xbf16>
      %213 = vector.shape_cast %212 : vector<1x8x8xbf16> to vector<8x8xbf16>
      %214 = vector.shape_cast %211 : vector<8x8xbf16> to vector<1x8x8xbf16>
      tpu.vector_store %arg18[%c1_133, %c0_134, %c0_135], %214 {strides = array<i32>} : memref<4x8x8xbf16, #tpu.memory_space<vmem>>, vector<1x8x8xbf16>,
      %c2_136 = arith.constant 2 : index
      %c0_137 = arith.constant 0 : index
      %c0_138 = arith.constant 0 : index
      %215 = vector.load %arg4[%c2_136, %c0_137, %c0_138] : memref<4x32x8xbf16, #tpu.memory_space<vmem>>, vector<1x32x8xbf16>
      %216 = vector.shape_cast %215 : vector<1x32x8xbf16> to vector<32x8xbf16>
      %cst_139 = arith.constant dense<0.000000e+00> : vector<8x8xf32>
      %217 = tpu.matmul %186, %216, %cst_139 {dimension_numbers = #tpu.dot_dimension_numbers<[1], [0], [0], [1], [0, 0, 1, 1], [], []>} : vector<8x32xbf16>, vector<32x8xbf16>, vector<8x8xf32> -> vector<8x8xf32>
      %218 = arith.truncf %217 : vector<8x8xf32> to vector<8x8xbf16>
      %c2_140 = arith.constant 2 : index
      %c0_141 = arith.constant 0 : index
      %c0_142 = arith.constant 0 : index
      %219 = vector.load %arg17[%c2_140, %c0_141, %c0_142] : memref<4x8x8xbf16, #tpu.memory_space<vmem>>, vector<1x8x8xbf16>
      %220 = vector.shape_cast %219 : vector<1x8x8xbf16> to vector<8x8xbf16>
      %221 = vector.shape_cast %218 : vector<8x8xbf16> to vector<1x8x8xbf16>
      tpu.vector_store %arg17[%c2_140, %c0_141, %c0_142], %221 {strides = array<i32>} : memref<4x8x8xbf16, #tpu.memory_space<vmem>>, vector<1x8x8xbf16>,
      %c2_143 = arith.constant 2 : index
      %c0_144 = arith.constant 0 : index
      %c0_145 = arith.constant 0 : index
      %222 = vector.load %arg5[%c2_143, %c0_144, %c0_145] : memref<4x32x8xbf16, #tpu.memory_space<vmem>>, vector<1x32x8xbf16>
      %223 = vector.shape_cast %222 : vector<1x32x8xbf16> to vector<32x8xbf16>
      %cst_146 = arith.constant dense<0.000000e+00> : vector<8x8xf32>
      %224 = tpu.matmul %186, %223, %cst_146 {dimension_numbers = #tpu.dot_dimension_numbers<[1], [0], [0], [1], [0, 0, 1, 1], [], []>} : vector<8x32xbf16>, vector<32x8xbf16>, vector<8x8xf32> -> vector<8x8xf32>
      %225 = arith.truncf %224 : vector<8x8xf32> to vector<8x8xbf16>
      %c2_147 = arith.constant 2 : index
      %c0_148 = arith.constant 0 : index
      %c0_149 = arith.constant 0 : index
      %226 = vector.load %arg18[%c2_147, %c0_148, %c0_149] : memref<4x8x8xbf16, #tpu.memory_space<vmem>>, vector<1x8x8xbf16>
      %227 = vector.shape_cast %226 : vector<1x8x8xbf16> to vector<8x8xbf16>
      %228 = vector.shape_cast %225 : vector<8x8xbf16> to vector<1x8x8xbf16>
      tpu.vector_store %arg18[%c2_147, %c0_148, %c0_149], %228 {strides = array<i32>} : memref<4x8x8xbf16, #tpu.memory_space<vmem>>, vector<1x8x8xbf16>,
      %c3_150 = arith.constant 3 : index
      %c0_151 = arith.constant 0 : index
      %c0_152 = arith.constant 0 : index
      %229 = vector.load %arg4[%c3_150, %c0_151, %c0_152] : memref<4x32x8xbf16, #tpu.memory_space<vmem>>, vector<1x32x8xbf16>
      %230 = vector.shape_cast %229 : vector<1x32x8xbf16> to vector<32x8xbf16>
      %cst_153 = arith.constant dense<0.000000e+00> : vector<8x8xf32>
      %231 = tpu.matmul %186, %230, %cst_153 {dimension_numbers = #tpu.dot_dimension_numbers<[1], [0], [0], [1], [0, 0, 1, 1], [], []>} : vector<8x32xbf16>, vector<32x8xbf16>, vector<8x8xf32> -> vector<8x8xf32>
      %232 = arith.truncf %231 : vector<8x8xf32> to vector<8x8xbf16>
      %c3_154 = arith.constant 3 : index
      %c0_155 = arith.constant 0 : index
      %c0_156 = arith.constant 0 : index
      %233 = vector.load %arg17[%c3_154, %c0_155, %c0_156] : memref<4x8x8xbf16, #tpu.memory_space<vmem>>, vector<1x8x8xbf16>
      %234 = vector.shape_cast %233 : vector<1x8x8xbf16> to vector<8x8xbf16>
      %235 = vector.shape_cast %232 : vector<8x8xbf16> to vector<1x8x8xbf16>
      tpu.vector_store %arg17[%c3_154, %c0_155, %c0_156], %235 {strides = array<i32>} : memref<4x8x8xbf16, #tpu.memory_space<vmem>>, vector<1x8x8xbf16>,
      %c3_157 = arith.constant 3 : index
      %c0_158 = arith.constant 0 : index
      %c0_159 = arith.constant 0 : index
      %236 = vector.load %arg5[%c3_157, %c0_158, %c0_159] : memref<4x32x8xbf16, #tpu.memory_space<vmem>>, vector<1x32x8xbf16>
      %237 = vector.shape_cast %236 : vector<1x32x8xbf16> to vector<32x8xbf16>
      %cst_160 = arith.constant dense<0.000000e+00> : vector<8x8xf32>
      %238 = tpu.matmul %186, %237, %cst_160 {dimension_numbers = #tpu.dot_dimension_numbers<[1], [0], [0], [1], [0, 0, 1, 1], [], []>} : vector<8x32xbf16>, vector<32x8xbf16>, vector<8x8xf32> -> vector<8x8xf32>
      %239 = arith.truncf %238 : vector<8x8xf32> to vector<8x8xbf16>
      %c3_161 = arith.constant 3 : index
      %c0_162 = arith.constant 0 : index
      %c0_163 = arith.constant 0 : index
      %240 = vector.load %arg18[%c3_161, %c0_162, %c0_163] : memref<4x8x8xbf16, #tpu.memory_space<vmem>>, vector<1x8x8xbf16>
      %241 = vector.shape_cast %240 : vector<1x8x8xbf16> to vector<8x8xbf16>
      %242 = vector.shape_cast %239 : vector<8x8xbf16> to vector<1x8x8xbf16>
      tpu.vector_store %arg18[%c3_161, %c0_162, %c0_163], %242 {strides = array<i32>} : memref<4x8x8xbf16, #tpu.memory_space<vmem>>, vector<1x8x8xbf16>,
    } else {
    }
    %c8_i32 = arith.constant 8 : i32
    %3 = arith.muli %arg1, %c8_i32 : i32
    %4 = tpu.assume_multiple %3, 8 : i32
    %c0 = arith.constant 0 : index
    %5 = arith.index_cast %4 : i32 to index
    %c0_1 = arith.constant 0 : index
    %6 = vector.load %arg2[%c0, %5, %c0_1] : memref<1x8x32xf32, #tpu.memory_space<vmem>>, vector<1x8x32xf32>
    %7 = vector.shape_cast %6 : vector<1x8x32xf32> to vector<8x32xf32>
    %8 = arith.truncf %7 : vector<8x32xf32> to vector<8x32xbf16>
    %cst = arith.constant 0.000000e+00 : f32
    %9 = vector.broadcast %cst : f32 to vector<8x32xf32>
    %c0_2 = arith.constant 0 : index
    %c0_3 = arith.constant 0 : index
    %c0_4 = arith.constant 0 : index
    %10 = vector.load %arg3[%c0_2, %c0_3, %c0_4] : memref<4x32x8xbf16, #tpu.memory_space<vmem>>, vector<1x32x8xbf16>
    %11 = vector.shape_cast %10 : vector<1x32x8xbf16> to vector<32x8xbf16>
    %cst_5 = arith.constant dense<0.000000e+00> : vector<8x8xf32>
    %12 = tpu.matmul %8, %11, %cst_5 {dimension_numbers = #tpu.dot_dimension_numbers<[1], [0], [0], [1], [0, 0, 1, 1], [], []>} : vector<8x32xbf16>, vector<32x8xbf16>, vector<8x8xf32> -> vector<8x8xf32>
    %13 = arith.truncf %12 : vector<8x8xf32> to vector<8x8xbf16>
    %c0_6 = arith.constant 0 : index
    %c0_7 = arith.constant 0 : index
    %c0_8 = arith.constant 0 : index
    %14 = vector.load %arg17[%c0_6, %c0_7, %c0_8] : memref<4x8x8xbf16, #tpu.memory_space<vmem>>, vector<1x8x8xbf16>
    %15 = vector.shape_cast %14 : vector<1x8x8xbf16> to vector<8x8xbf16>
    %cst_9 = arith.constant dense<0.000000e+00> : vector<8x8xf32>
    %16 = tpu.matmul %13, %15, %cst_9 {dimension_numbers = #tpu.dot_dimension_numbers<[1], [1], [0], [0], [0, 0, 1, 0], [], []>} : vector<8x8xbf16>, vector<8x8xbf16>, vector<8x8xf32> -> vector<8x8xf32>
    %cst_10 = arith.constant dense<0xFF800000> : vector<8xf32>
    %17 = vector.multi_reduction <maximumf>, %16, %cst_10 [1] : vector<8x8xf32> to vector<8xf32>
    %18 = vector.shape_cast %17 : vector<8xf32> to vector<8x1xf32>
    %19 = vector.broadcast %18 : vector<8x1xf32> to vector<8x8xf32>
    %20 = arith.subf %16, %19 : vector<8x8xf32>
    %21 = math.exp %20 : vector<8x8xf32>
    %cst_11 = arith.constant dense<0.000000e+00> : vector<8xf32>
    %22 = vector.multi_reduction <add>, %21, %cst_11 [1] : vector<8x8xf32> to vector<8xf32>
    %23 = vector.shape_cast %22 : vector<8xf32> to vector<8x1xf32>
    %24 = tpu.reciprocal %23 {approx = true} : vector<8x1xf32> -> vector<8x1xf32>
    %25 = vector.broadcast %24 : vector<8x1xf32> to vector<8x8xf32>
    %26 = arith.mulf %21, %25 : vector<8x8xf32>
    %27 = arith.truncf %26 : vector<8x8xf32> to vector<8x8xbf16>
    %c0_12 = arith.constant 0 : index
    %c0_13 = arith.constant 0 : index
    %c0_14 = arith.constant 0 : index
    %28 = vector.load %arg18[%c0_12, %c0_13, %c0_14] : memref<4x8x8xbf16, #tpu.memory_space<vmem>>, vector<1x8x8xbf16>
    %29 = vector.shape_cast %28 : vector<1x8x8xbf16> to vector<8x8xbf16>
    %cst_15 = arith.constant dense<0.000000e+00> : vector<8x8xf32>
    %30 = tpu.matmul %27, %29, %cst_15 {dimension_numbers = #tpu.dot_dimension_numbers<[1], [0], [0], [1], [0, 0, 1, 1], [], []>} : vector<8x8xbf16>, vector<8x8xbf16>, vector<8x8xf32> -> vector<8x8xf32>
    %31 = arith.truncf %30 : vector<8x8xf32> to vector<8x8xbf16>
    %c0_16 = arith.constant 0 : index
    %c0_17 = arith.constant 0 : index
    %c0_18 = arith.constant 0 : index
    %32 = vector.load %arg6[%c0_16, %c0_17, %c0_18] : memref<4x8x32xbf16, #tpu.memory_space<vmem>>, vector<1x8x32xbf16>
    %33 = vector.shape_cast %32 : vector<1x8x32xbf16> to vector<8x32xbf16>
    %cst_19 = arith.constant dense<0.000000e+00> : vector<8x32xf32>
    %34 = tpu.matmul %31, %33, %cst_19 {dimension_numbers = #tpu.dot_dimension_numbers<[1], [0], [0], [1], [0, 0, 1, 1], [], []>} : vector<8x8xbf16>, vector<8x32xbf16>, vector<8x32xf32> -> vector<8x32xf32>
    %35 = arith.addf %9, %34 : vector<8x32xf32>
    %c1 = arith.constant 1 : index
    %c0_20 = arith.constant 0 : index
    %c0_21 = arith.constant 0 : index
    %36 = vector.load %arg3[%c1, %c0_20, %c0_21] : memref<4x32x8xbf16, #tpu.memory_space<vmem>>, vector<1x32x8xbf16>
    %37 = vector.shape_cast %36 : vector<1x32x8xbf16> to vector<32x8xbf16>
    %cst_22 = arith.constant dense<0.000000e+00> : vector<8x8xf32>
    %38 = tpu.matmul %8, %37, %cst_22 {dimension_numbers = #tpu.dot_dimension_numbers<[1], [0], [0], [1], [0, 0, 1, 1], [], []>} : vector<8x32xbf16>, vector<32x8xbf16>, vector<8x8xf32> -> vector<8x8xf32>
    %39 = arith.truncf %38 : vector<8x8xf32> to vector<8x8xbf16>
    %c1_23 = arith.constant 1 : index
    %c0_24 = arith.constant 0 : index
    %c0_25 = arith.constant 0 : index
    %40 = vector.load %arg17[%c1_23, %c0_24, %c0_25] : memref<4x8x8xbf16, #tpu.memory_space<vmem>>, vector<1x8x8xbf16>
    %41 = vector.shape_cast %40 : vector<1x8x8xbf16> to vector<8x8xbf16>
    %cst_26 = arith.constant dense<0.000000e+00> : vector<8x8xf32>
    %42 = tpu.matmul %39, %41, %cst_26 {dimension_numbers = #tpu.dot_dimension_numbers<[1], [1], [0], [0], [0, 0, 1, 0], [], []>} : vector<8x8xbf16>, vector<8x8xbf16>, vector<8x8xf32> -> vector<8x8xf32>
    %cst_27 = arith.constant dense<0xFF800000> : vector<8xf32>
    %43 = vector.multi_reduction <maximumf>, %42, %cst_27 [1] : vector<8x8xf32> to vector<8xf32>
    %44 = vector.shape_cast %43 : vector<8xf32> to vector<8x1xf32>
    %45 = vector.broadcast %44 : vector<8x1xf32> to vector<8x8xf32>
    %46 = arith.subf %42, %45 : vector<8x8xf32>
    %47 = math.exp %46 : vector<8x8xf32>
    %cst_28 = arith.constant dense<0.000000e+00> : vector<8xf32>
    %48 = vector.multi_reduction <add>, %47, %cst_28 [1] : vector<8x8xf32> to vector<8xf32>
    %49 = vector.shape_cast %48 : vector<8xf32> to vector<8x1xf32>
    %50 = tpu.reciprocal %49 {approx = true} : vector<8x1xf32> -> vector<8x1xf32>
    %51 = vector.broadcast %50 : vector<8x1xf32> to vector<8x8xf32>
    %52 = arith.mulf %47, %51 : vector<8x8xf32>
    %53 = arith.truncf %52 : vector<8x8xf32> to vector<8x8xbf16>
    %c1_29 = arith.constant 1 : index
    %c0_30 = arith.constant 0 : index
    %c0_31 = arith.constant 0 : index
    %54 = vector.load %arg18[%c1_29, %c0_30, %c0_31] : memref<4x8x8xbf16, #tpu.memory_space<vmem>>, vector<1x8x8xbf16>
    %55 = vector.shape_cast %54 : vector<1x8x8xbf16> to vector<8x8xbf16>
    %cst_32 = arith.constant dense<0.000000e+00> : vector<8x8xf32>
    %56 = tpu.matmul %53, %55, %cst_32 {dimension_numbers = #tpu.dot_dimension_numbers<[1], [0], [0], [1], [0, 0, 1, 1], [], []>} : vector<8x8xbf16>, vector<8x8xbf16>, vector<8x8xf32> -> vector<8x8xf32>
    %57 = arith.truncf %56 : vector<8x8xf32> to vector<8x8xbf16>
    %c1_33 = arith.constant 1 : index
    %c0_34 = arith.constant 0 : index
    %c0_35 = arith.constant 0 : index
    %58 = vector.load %arg6[%c1_33, %c0_34, %c0_35] : memref<4x8x32xbf16, #tpu.memory_space<vmem>>, vector<1x8x32xbf16>
    %59 = vector.shape_cast %58 : vector<1x8x32xbf16> to vector<8x32xbf16>
    %cst_36 = arith.constant dense<0.000000e+00> : vector<8x32xf32>
    %60 = tpu.matmul %57, %59, %cst_36 {dimension_numbers = #tpu.dot_dimension_numbers<[1], [0], [0], [1], [0, 0, 1, 1], [], []>} : vector<8x8xbf16>, vector<8x32xbf16>, vector<8x32xf32> -> vector<8x32xf32>
    %61 = arith.addf %35, %60 : vector<8x32xf32>
    %c2 = arith.constant 2 : index
    %c0_37 = arith.constant 0 : index
    %c0_38 = arith.constant 0 : index
    %62 = vector.load %arg3[%c2, %c0_37, %c0_38] : memref<4x32x8xbf16, #tpu.memory_space<vmem>>, vector<1x32x8xbf16>
    %63 = vector.shape_cast %62 : vector<1x32x8xbf16> to vector<32x8xbf16>
    %cst_39 = arith.constant dense<0.000000e+00> : vector<8x8xf32>
    %64 = tpu.matmul %8, %63, %cst_39 {dimension_numbers = #tpu.dot_dimension_numbers<[1], [0], [0], [1], [0, 0, 1, 1], [], []>} : vector<8x32xbf16>, vector<32x8xbf16>, vector<8x8xf32> -> vector<8x8xf32>
    %65 = arith.truncf %64 : vector<8x8xf32> to vector<8x8xbf16>
    %c2_40 = arith.constant 2 : index
    %c0_41 = arith.constant 0 : index
    %c0_42 = arith.constant 0 : index
    %66 = vector.load %arg17[%c2_40, %c0_41, %c0_42] : memref<4x8x8xbf16, #tpu.memory_space<vmem>>, vector<1x8x8xbf16>
    %67 = vector.shape_cast %66 : vector<1x8x8xbf16> to vector<8x8xbf16>
    %cst_43 = arith.constant dense<0.000000e+00> : vector<8x8xf32>
    %68 = tpu.matmul %65, %67, %cst_43 {dimension_numbers = #tpu.dot_dimension_numbers<[1], [1], [0], [0], [0, 0, 1, 0], [], []>} : vector<8x8xbf16>, vector<8x8xbf16>, vector<8x8xf32> -> vector<8x8xf32>
    %cst_44 = arith.constant dense<0xFF800000> : vector<8xf32>
    %69 = vector.multi_reduction <maximumf>, %68, %cst_44 [1] : vector<8x8xf32> to vector<8xf32>
    %70 = vector.shape_cast %69 : vector<8xf32> to vector<8x1xf32>
    %71 = vector.broadcast %70 : vector<8x1xf32> to vector<8x8xf32>
    %72 = arith.subf %68, %71 : vector<8x8xf32>
    %73 = math.exp %72 : vector<8x8xf32>
    %cst_45 = arith.constant dense<0.000000e+00> : vector<8xf32>
    %74 = vector.multi_reduction <add>, %73, %cst_45 [1] : vector<8x8xf32> to vector<8xf32>
    %75 = vector.shape_cast %74 : vector<8xf32> to vector<8x1xf32>
    %76 = tpu.reciprocal %75 {approx = true} : vector<8x1xf32> -> vector<8x1xf32>
    %77 = vector.broadcast %76 : vector<8x1xf32> to vector<8x8xf32>
    %78 = arith.mulf %73, %77 : vector<8x8xf32>
    %79 = arith.truncf %78 : vector<8x8xf32> to vector<8x8xbf16>
    %c2_46 = arith.constant 2 : index
    %c0_47 = arith.constant 0 : index
    %c0_48 = arith.constant 0 : index
    %80 = vector.load %arg18[%c2_46, %c0_47, %c0_48] : memref<4x8x8xbf16, #tpu.memory_space<vmem>>, vector<1x8x8xbf16>
    %81 = vector.shape_cast %80 : vector<1x8x8xbf16> to vector<8x8xbf16>
    %cst_49 = arith.constant dense<0.000000e+00> : vector<8x8xf32>
    %82 = tpu.matmul %79, %81, %cst_49 {dimension_numbers = #tpu.dot_dimension_numbers<[1], [0], [0], [1], [0, 0, 1, 1], [], []>} : vector<8x8xbf16>, vector<8x8xbf16>, vector<8x8xf32> -> vector<8x8xf32>
    %83 = arith.truncf %82 : vector<8x8xf32> to vector<8x8xbf16>
    %c2_50 = arith.constant 2 : index
    %c0_51 = arith.constant 0 : index
    %c0_52 = arith.constant 0 : index
    %84 = vector.load %arg6[%c2_50, %c0_51, %c0_52] : memref<4x8x32xbf16, #tpu.memory_space<vmem>>, vector<1x8x32xbf16>
    %85 = vector.shape_cast %84 : vector<1x8x32xbf16> to vector<8x32xbf16>
    %cst_53 = arith.constant dense<0.000000e+00> : vector<8x32xf32>
    %86 = tpu.matmul %83, %85, %cst_53 {dimension_numbers = #tpu.dot_dimension_numbers<[1], [0], [0], [1], [0, 0, 1, 1], [], []>} : vector<8x8xbf16>, vector<8x32xbf16>, vector<8x32xf32> -> vector<8x32xf32>
    %87 = arith.addf %61, %86 : vector<8x32xf32>
    %c3 = arith.constant 3 : index
    %c0_54 = arith.constant 0 : index
    %c0_55 = arith.constant 0 : index
    %88 = vector.load %arg3[%c3, %c0_54, %c0_55] : memref<4x32x8xbf16, #tpu.memory_space<vmem>>, vector<1x32x8xbf16>
    %89 = vector.shape_cast %88 : vector<1x32x8xbf16> to vector<32x8xbf16>
    %cst_56 = arith.constant dense<0.000000e+00> : vector<8x8xf32>
    %90 = tpu.matmul %8, %89, %cst_56 {dimension_numbers = #tpu.dot_dimension_numbers<[1], [0], [0], [1], [0, 0, 1, 1], [], []>} : vector<8x32xbf16>, vector<32x8xbf16>, vector<8x8xf32> -> vector<8x8xf32>
    %91 = arith.truncf %90 : vector<8x8xf32> to vector<8x8xbf16>
    %c3_57 = arith.constant 3 : index
    %c0_58 = arith.constant 0 : index
    %c0_59 = arith.constant 0 : index
    %92 = vector.load %arg17[%c3_57, %c0_58, %c0_59] : memref<4x8x8xbf16, #tpu.memory_space<vmem>>, vector<1x8x8xbf16>
    %93 = vector.shape_cast %92 : vector<1x8x8xbf16> to vector<8x8xbf16>
    %cst_60 = arith.constant dense<0.000000e+00> : vector<8x8xf32>
    %94 = tpu.matmul %91, %93, %cst_60 {dimension_numbers = #tpu.dot_dimension_numbers<[1], [1], [0], [0], [0, 0, 1, 0], [], []>} : vector<8x8xbf16>, vector<8x8xbf16>, vector<8x8xf32> -> vector<8x8xf32>
    %cst_61 = arith.constant dense<0xFF800000> : vector<8xf32>
    %95 = vector.multi_reduction <maximumf>, %94, %cst_61 [1] : vector<8x8xf32> to vector<8xf32>
    %96 = vector.shape_cast %95 : vector<8xf32> to vector<8x1xf32>
    %97 = vector.broadcast %96 : vector<8x1xf32> to vector<8x8xf32>
    %98 = arith.subf %94, %97 : vector<8x8xf32>
    %99 = math.exp %98 : vector<8x8xf32>
    %cst_62 = arith.constant dense<0.000000e+00> : vector<8xf32>
    %100 = vector.multi_reduction <add>, %99, %cst_62 [1] : vector<8x8xf32> to vector<8xf32>
    %101 = vector.shape_cast %100 : vector<8xf32> to vector<8x1xf32>
    %102 = tpu.reciprocal %101 {approx = true} : vector<8x1xf32> -> vector<8x1xf32>
    %103 = vector.broadcast %102 : vector<8x1xf32> to vector<8x8xf32>
    %104 = arith.mulf %99, %103 : vector<8x8xf32>
    %105 = arith.truncf %104 : vector<8x8xf32> to vector<8x8xbf16>
    %c3_63 = arith.constant 3 : index
    %c0_64 = arith.constant 0 : index
    %c0_65 = arith.constant 0 : index
    %106 = vector.load %arg18[%c3_63, %c0_64, %c0_65] : memref<4x8x8xbf16, #tpu.memory_space<vmem>>, vector<1x8x8xbf16>
    %107 = vector.shape_cast %106 : vector<1x8x8xbf16> to vector<8x8xbf16>
    %cst_66 = arith.constant dense<0.000000e+00> : vector<8x8xf32>
    %108 = tpu.matmul %105, %107, %cst_66 {dimension_numbers = #tpu.dot_dimension_numbers<[1], [0], [0], [1], [0, 0, 1, 1], [], []>} : vector<8x8xbf16>, vector<8x8xbf16>, vector<8x8xf32> -> vector<8x8xf32>
    %109 = arith.truncf %108 : vector<8x8xf32> to vector<8x8xbf16>
    %c3_67 = arith.constant 3 : index
    %c0_68 = arith.constant 0 : index
    %c0_69 = arith.constant 0 : index
    %110 = vector.load %arg6[%c3_67, %c0_68, %c0_69] : memref<4x8x32xbf16, #tpu.memory_space<vmem>>, vector<1x8x32xbf16>
    %111 = vector.shape_cast %110 : vector<1x8x32xbf16> to vector<8x32xbf16>
    %cst_70 = arith.constant dense<0.000000e+00> : vector<8x32xf32>
    %112 = tpu.matmul %109, %111, %cst_70 {dimension_numbers = #tpu.dot_dimension_numbers<[1], [0], [0], [1], [0, 0, 1, 1], [], []>} : vector<8x8xbf16>, vector<8x32xbf16>, vector<8x32xf32> -> vector<8x32xf32>
    %113 = arith.addf %87, %112 : vector<8x32xf32>
    %c0_71 = arith.constant 0 : index
    %c0_72 = arith.constant 0 : index
    %114 = vector.load %arg7[%c0_71, %c0_72] : memref<1x32xf32, #tpu.memory_space<vmem>>, vector<1x32xf32>
    %115 = vector.broadcast %114 : vector<1x32xf32> to vector<8x32xf32>
    %116 = arith.addf %113, %115 : vector<8x32xf32>
    %117 = arith.addf %7, %116 : vector<8x32xf32>
    %c0_73 = arith.constant 0 : index
    %c0_74 = arith.constant 0 : index
    %118 = vector.load %arg8[%c0_73, %c0_74] : memref<1x32xf32, #tpu.memory_space<vmem>>, vector<1x32xf32>
    %c0_75 = arith.constant 0 : index
    %c0_76 = arith.constant 0 : index
    %119 = vector.load %arg9[%c0_75, %c0_76] : memref<1x32xf32, #tpu.memory_space<vmem>>, vector<1x32xf32>
    %cst_77 = arith.constant dense<0.000000e+00> : vector<8xf32>
    %120 = vector.multi_reduction <add>, %117, %cst_77 [1] : vector<8x32xf32> to vector<8xf32>
    %121 = vector.shape_cast %120 : vector<8xf32> to vector<8x1xf32>
    %cst_78 = arith.constant 3.200000e+01 : f32
    %122 = vector.broadcast %cst_78 : f32 to vector<8x1xf32>
    %123 = arith.divf %121, %122 : vector<8x1xf32>
    %124 = arith.mulf %117, %117 : vector<8x32xf32>
    %cst_79 = arith.constant dense<0.000000e+00> : vector<8xf32>
    %125 = vector.multi_reduction <add>, %124, %cst_79 [1] : vector<8x32xf32> to vector<8xf32>
    %126 = vector.shape_cast %125 : vector<8xf32> to vector<8x1xf32>
    %cst_80 = arith.constant 3.200000e+01 : f32
    %127 = vector.broadcast %cst_80 : f32 to vector<8x1xf32>
    %128 = arith.divf %126, %127 : vector<8x1xf32>
    %129 = arith.mulf %123, %123 : vector<8x1xf32>
    %130 = arith.subf %128, %129 : vector<8x1xf32>
    %cst_81 = arith.constant 9.99999997E-7 : f32
    %131 = vector.broadcast %cst_81 : f32 to vector<8x1xf32>
    %132 = arith.addf %130, %131 : vector<8x1xf32>
    %133 = math.rsqrt %132 : vector<8x1xf32>
    %134 = vector.broadcast %123 : vector<8x1xf32> to vector<8x32xf32>
    %135 = arith.subf %117, %134 : vector<8x32xf32>
    %136 = vector.broadcast %133 : vector<8x1xf32> to vector<8x32xf32>
    %137 = arith.mulf %135, %136 : vector<8x32xf32>
    %138 = vector.broadcast %118 : vector<1x32xf32> to vector<8x32xf32>
    %139 = arith.mulf %138, %137 : vector<8x32xf32>
    %140 = vector.broadcast %119 : vector<1x32xf32> to vector<8x32xf32>
    %141 = arith.addf %139, %140 : vector<8x32xf32>
    %142 = arith.truncf %141 : vector<8x32xf32> to vector<8x32xbf16>
    %c0_82 = arith.constant 0 : index
    %c0_83 = arith.constant 0 : index
    %143 = vector.load %arg10[%c0_82, %c0_83] : memref<32x64xbf16, #tpu.memory_space<vmem>>, vector<32x64xbf16>
    %cst_84 = arith.constant dense<0.000000e+00> : vector<8x64xf32>
    %144 = tpu.matmul %142, %143, %cst_84 {dimension_numbers = #tpu.dot_dimension_numbers<[1], [0], [0], [1], [0, 0, 1, 1], [], []>} : vector<8x32xbf16>, vector<32x64xbf16>, vector<8x64xf32> -> vector<8x64xf32>
    %c0_85 = arith.constant 0 : index
    %c0_86 = arith.constant 0 : index
    %145 = vector.load %arg11[%c0_85, %c0_86] : memref<1x64xf32, #tpu.memory_space<vmem>>, vector<1x64xf32>
    %146 = vector.broadcast %145 : vector<1x64xf32> to vector<8x64xf32>
    %147 = arith.addf %144, %146 : vector<8x64xf32>
    %cst_87 = arith.constant 0.000000e+00 : f32
    %148 = vector.broadcast %cst_87 : f32 to vector<8x64xf32>
    %149 = arith.maximumf %147, %148 : vector<8x64xf32>
    %150 = arith.truncf %149 : vector<8x64xf32> to vector<8x64xbf16>
    %c0_88 = arith.constant 0 : index
    %c0_89 = arith.constant 0 : index
    %151 = vector.load %arg12[%c0_88, %c0_89] : memref<64x32xbf16, #tpu.memory_space<vmem>>, vector<64x32xbf16>
    %cst_90 = arith.constant dense<0.000000e+00> : vector<8x32xf32>
    %152 = tpu.matmul %150, %151, %cst_90 {dimension_numbers = #tpu.dot_dimension_numbers<[1], [0], [0], [1], [0, 0, 1, 1], [], []>} : vector<8x64xbf16>, vector<64x32xbf16>, vector<8x32xf32> -> vector<8x32xf32>
    %c0_91 = arith.constant 0 : index
    %c0_92 = arith.constant 0 : index
    %153 = vector.load %arg13[%c0_91, %c0_92] : memref<1x32xf32, #tpu.memory_space<vmem>>, vector<1x32xf32>
    %154 = vector.broadcast %153 : vector<1x32xf32> to vector<8x32xf32>
    %155 = arith.addf %152, %154 : vector<8x32xf32>
    %156 = arith.addf %141, %155 : vector<8x32xf32>
    %c0_93 = arith.constant 0 : index
    %c0_94 = arith.constant 0 : index
    %157 = vector.load %arg14[%c0_93, %c0_94] : memref<1x32xf32, #tpu.memory_space<vmem>>, vector<1x32xf32>
    %c0_95 = arith.constant 0 : index
    %c0_96 = arith.constant 0 : index
    %158 = vector.load %arg15[%c0_95, %c0_96] : memref<1x32xf32, #tpu.memory_space<vmem>>, vector<1x32xf32>
    %cst_97 = arith.constant dense<0.000000e+00> : vector<8xf32>
    %159 = vector.multi_reduction <add>, %156, %cst_97 [1] : vector<8x32xf32> to vector<8xf32>
    %160 = vector.shape_cast %159 : vector<8xf32> to vector<8x1xf32>
    %cst_98 = arith.constant 3.200000e+01 : f32
    %161 = vector.broadcast %cst_98 : f32 to vector<8x1xf32>
    %162 = arith.divf %160, %161 : vector<8x1xf32>
    %163 = arith.mulf %156, %156 : vector<8x32xf32>
    %cst_99 = arith.constant dense<0.000000e+00> : vector<8xf32>
    %164 = vector.multi_reduction <add>, %163, %cst_99 [1] : vector<8x32xf32> to vector<8xf32>
    %165 = vector.shape_cast %164 : vector<8xf32> to vector<8x1xf32>
    %cst_100 = arith.constant 3.200000e+01 : f32
    %166 = vector.broadcast %cst_100 : f32 to vector<8x1xf32>
    %167 = arith.divf %165, %166 : vector<8x1xf32>
    %168 = arith.mulf %162, %162 : vector<8x1xf32>
    %169 = arith.subf %167, %168 : vector<8x1xf32>
    %cst_101 = arith.constant 9.99999997E-7 : f32
    %170 = vector.broadcast %cst_101 : f32 to vector<8x1xf32>
    %171 = arith.addf %169, %170 : vector<8x1xf32>
    %172 = math.rsqrt %171 : vector<8x1xf32>
    %173 = vector.broadcast %162 : vector<8x1xf32> to vector<8x32xf32>
    %174 = arith.subf %156, %173 : vector<8x32xf32>
    %175 = vector.broadcast %172 : vector<8x1xf32> to vector<8x32xf32>
    %176 = arith.mulf %174, %175 : vector<8x32xf32>
    %177 = vector.broadcast %157 : vector<1x32xf32> to vector<8x32xf32>
    %178 = arith.mulf %177, %176 : vector<8x32xf32>
    %179 = vector.broadcast %158 : vector<1x32xf32> to vector<8x32xf32>
    %180 = arith.addf %178, %179 : vector<8x32xf32>
    %c0_102 = arith.constant 0 : index
    %c0_103 = arith.constant 0 : index
    %c0_104 = arith.constant 0 : index
    %181 = vector.load %arg16[%c0_102, %c0_103, %c0_104] : memref<1x8x32xf32, #tpu.memory_space<vmem>>, vector<1x8x32xf32>
    %182 = vector.shape_cast %181 : vector<1x8x32xf32> to vector<8x32xf32>
    %183 = vector.shape_cast %180 : vector<8x32xf32> to vector<1x8x32xf32>
    tpu.vector_store %arg16[%c0_102, %c0_103, %c0_104], %183 {strides = array<i32>} : memref<1x8x32xf32, #tpu.memory_space<vmem>>, vector<1x8x32xf32>,
    return
  }
  func.func @transform_0(%arg0: i32, %arg1: i32) -> (i32, i32, i32) {
    %c0_i32 = arith.constant 0 : i32
    %c0_i32_0 = arith.constant 0 : i32
    %c0_i32_1 = arith.constant 0 : i32
    return %arg0, %c0_i32, %c0_i32_0 : i32, i32, i32
  }
  func.func @transform_1(%arg0: i32, %arg1: i32) -> (i32, i32, i32) {
    %c0_i32 = arith.constant 0 : i32
    %c0_i32_0 = arith.constant 0 : i32
    %c0_i32_1 = arith.constant 0 : i32
    %c0_i32_2 = arith.constant 0 : i32
    return %c0_i32, %c0_i32_0, %c0_i32_1 : i32, i32, i32
  }
  func.func @transform_2(%arg0: i32, %arg1: i32) -> (i32, i32, i32) {
    %c0_i32 = arith.constant 0 : i32
    %c0_i32_0 = arith.constant 0 : i32
    %c0_i32_1 = arith.constant 0 : i32
    %c0_i32_2 = arith.constant 0 : i32
    return %c0_i32, %c0_i32_0, %c0_i32_1 : i32, i32, i32
  }
  func.func @transform_3(%arg0: i32, %arg1: i32) -> (i32, i32, i32) {
    %c0_i32 = arith.constant 0 : i32
    %c0_i32_0 = arith.constant 0 : i32
    %c0_i32_1 = arith.constant 0 : i32
    %c0_i32_2 = arith.constant 0 : i32
    return %c0_i32, %c0_i32_0, %c0_i32_1 : i32, i32, i32
  }
  func.func @transform_4(%arg0: i32, %arg1: i32) -> (i32, i32, i32) {
    %c0_i32 = arith.constant 0 : i32
    %c0_i32_0 = arith.constant 0 : i32
    %c0_i32_1 = arith.constant 0 : i32
    %c0_i32_2 = arith.constant 0 : i32
    return %c0_i32, %c0_i32_0, %c0_i32_1 : i32, i32, i32
  }
  func.func @transform_5(%arg0: i32, %arg1: i32) -> (i32, i32) {
    %c0_i32 = arith.constant 0 : i32
    %c0_i32_0 = arith.constant 0 : i32
    %c0_i32_1 = arith.constant 0 : i32
    return %c0_i32, %c0_i32_0 : i32, i32
  }
  func.func @transform_6(%arg0: i32, %arg1: i32) -> (i32, i32) {
    %c0_i32 = arith.constant 0 : i32
    %c0_i32_0 = arith.constant 0 : i32
    %c0_i32_1 = arith.constant 0 : i32
    return %c0_i32, %c0_i32_0 : i32, i32
  }
  func.func @transform_7(%arg0: i32, %arg1: i32) -> (i32, i32) {
    %c0_i32 = arith.constant 0 : i32
    %c0_i32_0 = arith.constant 0 : i32
    %c0_i32_1 = arith.constant 0 : i32
    return %c0_i32, %c0_i32_0 : i32, i32
  }
  func.func @transform_8(%arg0: i32, %arg1: i32) -> (i32, i32) {
    %c0_i32 = arith.constant 0 : i32
    %c0_i32_0 = arith.constant 0 : i32
    %c0_i32_1 = arith.constant 0 : i32
    return %c0_i32, %c0_i32_0 : i32, i32
  }
  func.func @transform_9(%arg0: i32, %arg1: i32) -> (i32, i32) {
    %c0_i32 = arith.constant 0 : i32
    %c0_i32_0 = arith.constant 0 : i32
    %c0_i32_1 = arith.constant 0 : i32
    return %c0_i32, %c0_i32_0 : i32, i32
  }
  func.func @transform_10(%arg0: i32, %arg1: i32) -> (i32, i32) {
    %c0_i32 = arith.constant 0 : i32
    %c0_i32_0 = arith.constant 0 : i32
    %c0_i32_1 = arith.constant 0 : i32
    return %c0_i32, %c0_i32_0 : i32, i32
  }
  func.func @transform_11(%arg0: i32, %arg1: i32) -> (i32, i32) {
    %c0_i32 = arith.constant 0 : i32
    %c0_i32_0 = arith.constant 0 : i32
    %c0_i32_1 = arith.constant 0 : i32
    return %c0_i32, %c0_i32_0 : i32, i32
  }
  func.func @transform_12(%arg0: i32, %arg1: i32) -> (i32, i32) {
    %c0_i32 = arith.constant 0 : i32
    %c0_i32_0 = arith.constant 0 : i32
    %c0_i32_1 = arith.constant 0 : i32
    return %c0_i32, %c0_i32_0 : i32, i32
  }
  func.func @transform_13(%arg0: i32, %arg1: i32) -> (i32, i32) {
    %c0_i32 = arith.constant 0 : i32
    %c0_i32_0 = arith.constant 0 : i32
    %c0_i32_1 = arith.constant 0 : i32
    return %c0_i32, %c0_i32_0 : i32, i32
  }
  func.func @transform_14(%arg0: i32, %arg1: i32) -> (i32, i32, i32) {
    %c0_i32 = arith.constant 0 : i32
    %c0_i32_0 = arith.constant 0 : i32
    return %arg0, %arg1, %c0_i32 : i32, i32, i32
  }
}

</mosaic_0001>

<llo_original>
// kernel: tpu_custom_call.1
$region0: #{tpu_custom_call.1}
  #allocation0 [shape = 'u32[]', space=smem, size = 0x4, offset = 0x4, fixed_abs, tag = 'smem constant byte address 0x4 - core index']
  #allocation1 [shape = 'u32[144,128]{1,0:T(1,128)}', space=vmem, size = 0x12000, scoped, tag = 'internal scratch']
  #allocation2 [shape = 'bf16[4,8,8]{2,1,0:T(8,128)(2,1)}', space=vmem, size = 0x2000, scoped, tag = 'scratch operand']
  #allocation3 [shape = 'bf16[4,8,8]{2,1,0:T(8,128)(2,1)}', space=vmem, size = 0x2000, scoped, tag = 'scratch operand']
  %s0 = inlined_call_operand.vmem [shape: f32[2,8,32], index: 0, kind: input, shape index: {}]
  %s1 = inlined_call_operand.vmem [shape: bf16[4,32,8], index: 1, kind: input, shape index: {}]
  %s2 = inlined_call_operand.vmem [shape: bf16[4,32,8], index: 2, kind: input, shape index: {}]
  %s3 = inlined_call_operand.vmem [shape: bf16[4,32,8], index: 3, kind: input, shape index: {}]
  %s4 = inlined_call_operand.vmem [shape: bf16[4,8,32], index: 4, kind: input, shape index: {}]
  %s5 = inlined_call_operand.vmem [shape: f32[1,32], index: 5, kind: input, shape index: {}]
  %s6 = inlined_call_operand.vmem [shape: f32[1,32], index: 6, kind: input, shape index: {}]
  %s7 = inlined_call_operand.vmem [shape: f32[1,32], index: 7, kind: input, shape index: {}]
  %s8 = inlined_call_operand.vmem [shape: bf16[32,64], index: 8, kind: input, shape index: {}]
  %s9 = inlined_call_operand.vmem [shape: f32[1,64], index: 9, kind: input, shape index: {}]
  %s10 = inlined_call_operand.vmem [shape: bf16[64,32], index: 10, kind: input, shape index: {}]
  %s11 = inlined_call_operand.vmem [shape: f32[1,32], index: 11, kind: input, shape index: {}]
  %s12 = inlined_call_operand.vmem [shape: f32[1,32], index: 12, kind: input, shape index: {}]
  %s13 = inlined_call_operand.vmem [shape: f32[1,32], index: 13, kind: input, shape index: {}]
  %s14 = inlined_call_operand.hbm [shape: f32[2,8,32], index: 14, kind: output, shape index: {}]
  %s15 = sld [smem:[#allocation0]]
  $region93: #{tpu_custom_call.1} parent=0
    _
  %s17 = ssub.s32 1, %s15
  %s18 = scalar_select 0, %s17, %s15
  $region1: #{tpu_custom_call.1} parent=0
    #allocation4 [shape = 'u8[8192]{0}', space=vmem, size = 0x2000, scoped, tag = 'output window, operand 0']
    #allocation5 [shape = 's32[2]{0}', space=sflag, size = 0x8, scoped, tag = 'scoped memory for tpu_custom_call.1']
    %19 = vsyncpa [#allocation5], 0
    %s20 = scalar_lea.sflag [#allocation5], 1
    %21 = vsyncpa %s20, 0
    loop: start=0, step=1, limit=4
    $region2: #{tpu_custom_call.1} parent=1 // loop_pre_header
      _
    $region3: #{tpu_custom_call.1} parent=1 // loop_header
      %s23 = sphi 0, %s27
      %p24 = scmp.ge.s32.totalorder %s23, 4
      %s30 = sphi 0, %s42
      %s31 = sphi 0, %s38
      %s32 = sphi 0, %s30
      %s33 = sphi 0, %s31
      %s34 = sphi 0, %s32
      %s35 = sphi 0, %s33
      %s45 = sphi 0, %s47
      %s48 = sphi 0, %s45
      %s49 = sphi 0, %s48
      %s65 = sphi 0, %s49
      %s69 = sphi 0, %s69
      %s71 = sphi 0, %s69
      %s72 = sphi 0, %s71
      %s86 = sphi 0, %s72
      %s90 = sphi 0, %s90
      %s92 = sphi 0, %s90
      %s93 = sphi 0, %s92
      %s107 = sphi 0, %s93
      %s111 = sphi 0, %s111
      %s113 = sphi 0, %s111
      %s114 = sphi 0, %s113
      %s128 = sphi 0, %s114
      %s132 = sphi 0, %s132
      %s134 = sphi 0, %s132
      %s135 = sphi 0, %s134
      %s149 = sphi 0, %s135
      %s153 = sphi 0, %s153
      %s155 = sphi 0, %s153
      %s156 = sphi 0, %s155
      %s170 = sphi 0, %s156
      %s174 = sphi 0, %s174
      %s176 = sphi 0, %s174
      %s177 = sphi 0, %s176
      %s191 = sphi 0, %s177
      %s195 = sphi 0, %s195
      %s197 = sphi 0, %s195
      %s198 = sphi 0, %s197
      %s212 = sphi 0, %s198
      %s216 = sphi 0, %s216
      %s218 = sphi 0, %s216
      %s219 = sphi 0, %s218
      %s233 = sphi 0, %s219
      %s237 = sphi 0, %s237
      %s239 = sphi 0, %s237
      %s240 = sphi 0, %s239
      %s254 = sphi 0, %s240
      %s258 = sphi 0, %s258
      %s260 = sphi 0, %s258
      %s261 = sphi 0, %s260
      %s275 = sphi 0, %s261
      %s279 = sphi 0, %s279
      %s281 = sphi 0, %s279
      %s282 = sphi 0, %s281
      %s296 = sphi 0, %s282
      %s300 = sphi 0, %s300
      %s302 = sphi 0, %s300
      %s303 = sphi 0, %s302
      %s317 = sphi 0, %s303
      %s321 = sphi 0, %s321
      %s323 = sphi 0, %s321
      %s324 = sphi 0, %s323
      %s338 = sphi 0, %s324
      %s346 = sphi 0, %s348
      %s349 = sphi 0, %s346
      %s350 = sphi 0, %s349
      %s366 = sphi 0, %s350
    $region4: #{tpu_custom_call.1} parent=1 // loop_header_branch
      %26 = sbr.rel (%p24) target = $region8
    $region5: #{tpu_custom_call.1} parent=1 // loop_body
      %s28 = ssub.s32 %s23, 1
      %s29 = ssub.s32 %s23, 2
      %s36 = sadd.s32 1, %s31
      %p37 = scmp.ge.s32.totalorder %s36, 1
      %s38 = scalar_select %p37, 0, %s36
      %s39 = sadd.s32 1, %s30
      %s40 = scalar_select %p37, %s39, %s30
      %p41 = scmp.ge.s32.totalorder %s40, 2
      %s42 = scalar_select %p41, 0, %s40
      %s43 = ssub.s32 %s30, %s42
      %p44 = scmp.eq.s32.totalorder %s43, 0
      %s46 = sadd.s32 %s45, 1
      %s47 = scalar_select %p44, %s45, %s46
      %p50 = pneg %p44
      %p51 = scmp.eq.s32.totalorder %s23, 1
      %p52 = por %p50, %p51
      %p53 = scmp.ne.s32.totalorder %s45, %s48
      %p54 = scmp.eq.s32.totalorder %s23, 0
      %p55 = por %p53, %p54
      %p56 = scmp.ne.s32.totalorder %s45, %s48
      %p57 = scmp.eq.s32.totalorder %s28, 1
      %p58 = por %p56, %p57
      %p59 = scmp.ne.s32.totalorder %s48, %s49
      %p60 = scmp.eq.s32.totalorder %s28, 0
      %p61 = por %p59, %p60
      %p62 = scmp.ne.s32.totalorder %s48, %s49
      %p63 = scmp.eq.s32.totalorder %s29, 1
      %p64 = por %p62, %p63
      %p66 = scmp.ne.s32.totalorder %s49, %s65
      %p67 = scmp.eq.s32.totalorder %s29, 0
      %p68 = por %p66, %p67
      %s70 = sadd.s32 %s69, 1
      %p73 = scmp.eq.s32.totalorder %s23, 1
      %p74 = scmp.ne.s32.totalorder %s69, %s71
      %p75 = scmp.eq.s32.totalorder %s23, 0
      %p76 = por %p74, %p75
      %p77 = scmp.ne.s32.totalorder %s69, %s71
      %p78 = scmp.eq.s32.totalorder %s28, 1
      %p79 = por %p77, %p78
      %p80 = scmp.ne.s32.totalorder %s71, %s72
      %p81 = scmp.eq.s32.totalorder %s28, 0
      %p82 = por %p80, %p81
      %p83 = scmp.ne.s32.totalorder %s71, %s72
      %p84 = scmp.eq.s32.totalorder %s29, 1
      %p85 = por %p83, %p84
      %p87 = scmp.ne.s32.totalorder %s72, %s86
      %p88 = scmp.eq.s32.totalorder %s29, 0
      %p89 = por %p87, %p88
      %s91 = sadd.s32 %s90, 1
      %p94 = scmp.eq.s32.totalorder %s23, 1
      %p95 = scmp.ne.s32.totalorder %s90, %s92
      %p96 = scmp.eq.s32.totalorder %s23, 0
      %p97 = por %p95, %p96
      %p98 = scmp.ne.s32.totalorder %s90, %s92
      %p99 = scmp.eq.s32.totalorder %s28, 1
      %p100 = por %p98, %p99
      %p101 = scmp.ne.s32.totalorder %s92, %s93
      %p102 = scmp.eq.s32.totalorder %s28, 0
      %p103 = por %p101, %p102
      %p104 = scmp.ne.s32.totalorder %s92, %s93
      %p105 = scmp.eq.s32.totalorder %s29, 1
      %p106 = por %p104, %p105
      %p108 = scmp.ne.s32.totalorder %s93, %s107
      %p109 = scmp.eq.s32.totalorder %s29, 0
      %p110 = por %p108, %p109
      %s112 = sadd.s32 %s111, 1
      %p115 = scmp.eq.s32.totalorder %s23, 1
      %p116 = scmp.ne.s32.totalorder %s111, %s113
      %p117 = scmp.eq.s32.totalorder %s23, 0
      %p118 = por %p116, %p117
      %p119 = scmp.ne.s32.totalorder %s111, %s113
      %p120 = scmp.eq.s32.totalorder %s28, 1
      %p121 = por %p119, %p120
      %p122 = scmp.ne.s32.totalorder %s113, %s114
      %p123 = scmp.eq.s32.totalorder %s28, 0
      %p124 = por %p122, %p123
      %p125 = scmp.ne.s32.totalorder %s113, %s114
      %p126 = scmp.eq.s32.totalorder %s29, 1
      %p127 = por %p125, %p126
      %p129 = scmp.ne.s32.totalorder %s114, %s128
      %p130 = scmp.eq.s32.totalorder %s29, 0
      %p131 = por %p129, %p130
      %s133 = sadd.s32 %s132, 1
      %p136 = scmp.eq.s32.totalorder %s23, 1
      %p137 = scmp.ne.s32.totalorder %s132, %s134
      %p138 = scmp.eq.s32.totalorder %s23, 0
      %p139 = por %p137, %p138
      %p140 = scmp.ne.s32.totalorder %s132, %s134
      %p141 = scmp.eq.s32.totalorder %s28, 1
      %p142 = por %p140, %p141
      %p143 = scmp.ne.s32.totalorder %s134, %s135
      %p144 = scmp.eq.s32.totalorder %s28, 0
      %p145 = por %p143, %p144
      %p146 = scmp.ne.s32.totalorder %s134, %s135
      %p147 = scmp.eq.s32.totalorder %s29, 1
      %p148 = por %p146, %p147
      %p150 = scmp.ne.s32.totalorder %s135, %s149
      %p151 = scmp.eq.s32.totalorder %s29, 0
      %p152 = por %p150, %p151
      %s154 = sadd.s32 %s153, 1
      %p157 = scmp.eq.s32.totalorder %s23, 1
      %p158 = scmp.ne.s32.totalorder %s153, %s155
      %p159 = scmp.eq.s32.totalorder %s23, 0
      %p160 = por %p158, %p159
      %p161 = scmp.ne.s32.totalorder %s153, %s155
      %p162 = scmp.eq.s32.totalorder %s28, 1
      %p163 = por %p161, %p162
      %p164 = scmp.ne.s32.totalorder %s155, %s156
      %p165 = scmp.eq.s32.totalorder %s28, 0
      %p166 = por %p164, %p165
      %p167 = scmp.ne.s32.totalorder %s155, %s156
      %p168 = scmp.eq.s32.totalorder %s29, 1
      %p169 = por %p167, %p168
      %p171 = scmp.ne.s32.totalorder %s156, %s170
      %p172 = scmp.eq.s32.totalorder %s29, 0
      %p173 = por %p171, %p172
      %s175 = sadd.s32 %s174, 1
      %p178 = scmp.eq.s32.totalorder %s23, 1
      %p179 = scmp.ne.s32.totalorder %s174, %s176
      %p180 = scmp.eq.s32.totalorder %s23, 0
      %p181 = por %p179, %p180
      %p182 = scmp.ne.s32.totalorder %s174, %s176
      %p183 = scmp.eq.s32.totalorder %s28, 1
      %p184 = por %p182, %p183
      %p185 = scmp.ne.s32.totalorder %s176, %s177
      %p186 = scmp.eq.s32.totalorder %s28, 0
      %p187 = por %p185, %p186
      %p188 = scmp.ne.s32.totalorder %s176, %s177
      %p189 = scmp.eq.s32.totalorder %s29, 1
      %p190 = por %p188, %p189
      %p192 = scmp.ne.s32.totalorder %s177, %s191
      %p193 = scmp.eq.s32.totalorder %s29, 0
      %p194 = por %p192, %p193
      %s196 = sadd.s32 %s195, 1
      %p199 = scmp.eq.s32.totalorder %s23, 1
      %p200 = scmp.ne.s32.totalorder %s195, %s197
      %p201 = scmp.eq.s32.totalorder %s23, 0
      %p202 = por %p200, %p201
      %p203 = scmp.ne.s32.totalorder %s195, %s197
      %p204 = scmp.eq.s32.totalorder %s28, 1
      %p205 = por %p203, %p204
      %p206 = scmp.ne.s32.totalorder %s197, %s198
      %p207 = scmp.eq.s32.totalorder %s28, 0
      %p208 = por %p206, %p207
      %p209 = scmp.ne.s32.totalorder %s197, %s198
      %p210 = scmp.eq.s32.totalorder %s29, 1
      %p211 = por %p209, %p210
      %p213 = scmp.ne.s32.totalorder %s198, %s212
      %p214 = scmp.eq.s32.totalorder %s29, 0
      %p215 = por %p213, %p214
      %s217 = sadd.s32 %s216, 1
      %p220 = scmp.eq.s32.totalorder %s23, 1
      %p221 = scmp.ne.s32.totalorder %s216, %s218
      %p222 = scmp.eq.s32.totalorder %s23, 0
      %p223 = por %p221, %p222
      %p224 = scmp.ne.s32.totalorder %s216, %s218
      %p225 = scmp.eq.s32.totalorder %s28, 1
      %p226 = por %p224, %p225
      %p227 = scmp.ne.s32.totalorder %s218, %s219
      %p228 = scmp.eq.s32.totalorder %s28, 0
      %p229 = por %p227, %p228
      %p230 = scmp.ne.s32.totalorder %s218, %s219
      %p231 = scmp.eq.s32.totalorder %s29, 1
      %p232 = por %p230, %p231
      %p234 = scmp.ne.s32.totalorder %s219, %s233
      %p235 = scmp.eq.s32.totalorder %s29, 0
      %p236 = por %p234, %p235
      %s238 = sadd.s32 %s237, 1
      %p241 = scmp.eq.s32.totalorder %s23, 1
      %p242 = scmp.ne.s32.totalorder %s237, %s239
      %p243 = scmp.eq.s32.totalorder %s23, 0
      %p244 = por %p242, %p243
      %p245 = scmp.ne.s32.totalorder %s237, %s239
      %p246 = scmp.eq.s32.totalorder %s28, 1
      %p247 = por %p245, %p246
      %p248 = scmp.ne.s32.totalorder %s239, %s240
      %p249 = scmp.eq.s32.totalorder %s28, 0
      %p250 = por %p248, %p249
      %p251 = scmp.ne.s32.totalorder %s239, %s240
      %p252 = scmp.eq.s32.totalorder %s29, 1
      %p253 = por %p251, %p252
      %p255 = scmp.ne.s32.totalorder %s240, %s254
      %p256 = scmp.eq.s32.totalorder %s29, 0
      %p257 = por %p255, %p256
      %s259 = sadd.s32 %s258, 1
      %p262 = scmp.eq.s32.totalorder %s23, 1
      %p263 = scmp.ne.s32.totalorder %s258, %s260
      %p264 = scmp.eq.s32.totalorder %s23, 0
      %p265 = por %p263, %p264
      %p266 = scmp.ne.s32.totalorder %s258, %s260
      %p267 = scmp.eq.s32.totalorder %s28, 1
      %p268 = por %p266, %p267
      %p269 = scmp.ne.s32.totalorder %s260, %s261
      %p270 = scmp.eq.s32.totalorder %s28, 0
      %p271 = por %p269, %p270
      %p272 = scmp.ne.s32.totalorder %s260, %s261
      %p273 = scmp.eq.s32.totalorder %s29, 1
      %p274 = por %p272, %p273
      %p276 = scmp.ne.s32.totalorder %s261, %s275
      %p277 = scmp.eq.s32.totalorder %s29, 0
      %p278 = por %p276, %p277
      %s280 = sadd.s32 %s279, 1
      %p283 = scmp.eq.s32.totalorder %s23, 1
      %p284 = scmp.ne.s32.totalorder %s279, %s281
      %p285 = scmp.eq.s32.totalorder %s23, 0
      %p286 = por %p284, %p285
      %p287 = scmp.ne.s32.totalorder %s279, %s281
      %p288 = scmp.eq.s32.totalorder %s28, 1
      %p289 = por %p287, %p288
      %p290 = scmp.ne.s32.totalorder %s281, %s282
      %p291 = scmp.eq.s32.totalorder %s28, 0
      %p292 = por %p290, %p291
      %p293 = scmp.ne.s32.totalorder %s281, %s282
      %p294 = scmp.eq.s32.totalorder %s29, 1
      %p295 = por %p293, %p294
      %p297 = scmp.ne.s32.totalorder %s282, %s296
      %p298 = scmp.eq.s32.totalorder %s29, 0
      %p299 = por %p297, %p298
      %s301 = sadd.s32 %s300, 1
      %p304 = scmp.eq.s32.totalorder %s23, 1
      %p305 = scmp.ne.s32.totalorder %s300, %s302
      %p306 = scmp.eq.s32.totalorder %s23, 0
      %p307 = por %p305, %p306
      %p308 = scmp.ne.s32.totalorder %s300, %s302
      %p309 = scmp.eq.s32.totalorder %s28, 1
      %p310 = por %p308, %p309
      %p311 = scmp.ne.s32.totalorder %s302, %s303
      %p312 = scmp.eq.s32.totalorder %s28, 0
      %p313 = por %p311, %p312
      %p314 = scmp.ne.s32.totalorder %s302, %s303
      %p315 = scmp.eq.s32.totalorder %s29, 1
      %p316 = por %p314, %p315
      %p318 = scmp.ne.s32.totalorder %s303, %s317
      %p319 = scmp.eq.s32.totalorder %s29, 0
      %p320 = por %p318, %p319
      %s322 = sadd.s32 %s321, 1
      %p325 = scmp.eq.s32.totalorder %s23, 1
      %p326 = scmp.ne.s32.totalorder %s321, %s323
      %p327 = scmp.eq.s32.totalorder %s23, 0
      %p328 = por %p326, %p327
      %p329 = scmp.ne.s32.totalorder %s321, %s323
      %p330 = scmp.eq.s32.totalorder %s28, 1
      %p331 = por %p329, %p330
      %p332 = scmp.ne.s32.totalorder %s323, %s324
      %p333 = scmp.eq.s32.totalorder %s28, 0
      %p334 = por %p332, %p333
      %p335 = scmp.ne.s32.totalorder %s323, %s324
      %p336 = scmp.eq.s32.totalorder %s29, 1
      %p337 = por %p335, %p336
      %p339 = scmp.ne.s32.totalorder %s324, %s338
      %p340 = scmp.eq.s32.totalorder %s29, 0
      %p341 = por %p339, %p340
      %s342 = ssub.s32 %s30, %s42
      %s343 = ssub.s32 %s31, %s38
      %s344 = sor.u32 %s342, %s343
      %p345 = scmp.eq.s32.totalorder %s344, 0
      %s347 = sadd.s32 %s346, 1
      %s348 = scalar_select %p345, %s346, %s347
      %p351 = pneg %p345
      %p352 = scmp.eq.s32.totalorder %s23, 1
      %p353 = por %p351, %p352
      %p354 = scmp.ne.s32.totalorder %s346, %s349
      %p355 = scmp.eq.s32.totalorder %s23, 0
      %p356 = por %p354, %p355
      %p357 = scmp.ne.s32.totalorder %s346, %s349
      %p358 = scmp.eq.s32.totalorder %s28, 1
      %p359 = por %p357, %p358
      %p360 = scmp.ne.s32.totalorder %s349, %s350
      %p361 = scmp.eq.s32.totalorder %s28, 0
      %p362 = por %p360, %p361
      %p363 = scmp.ne.s32.totalorder %s349, %s350
      %p364 = scmp.eq.s32.totalorder %s29, 1
      %p365 = por %p363, %p364
      %p367 = scmp.ne.s32.totalorder %s350, %s366
      %p368 = scmp.eq.s32.totalorder %s29, 0
      %p369 = por %p367, %p368
      %p370 = scmp.le.s32.totalorder 1, %s23
      %p371 = scmp.lt.s32.totalorder %s23, 3
      %p372 = pnand %p370, %p371
      %p373 = pneg %p372
      // Predicated region
      $region9: #{tpu_custom_call.1} parent=5 // pred_check
        _
      $region10: #{tpu_custom_call.1} parent=5 // pred_check_branch
        %375 = sbr.rel (%p372) target = $region12
      $region11: #{tpu_custom_call.1} parent=5 // pred_region
        %s376 = ssub.s32 %s23, 1
        // Predicated region
        $region13: #{tpu_custom_call.1} parent=11 // pred_check
          %p377 = pneg %p82
        $region14: #{tpu_custom_call.1} parent=11 // pred_check_branch
          %379 = sbr.rel (%p377) target = $region16
        $region15: #{tpu_custom_call.1} parent=11 // pred_region
          _
        $region16: #{tpu_custom_call.1} parent=11 // pred_fallthru
          _
        // Predicated region
        $region17: #{tpu_custom_call.1} parent=11 // pred_check
          %p380 = pneg %p103
        $region18: #{tpu_custom_call.1} parent=11 // pred_check_branch
          %382 = sbr.rel (%p380) target = $region20
        $region19: #{tpu_custom_call.1} parent=11 // pred_region
          _
        $region20: #{tpu_custom_call.1} parent=11 // pred_fallthru
          _
        // Predicated region
        $region21: #{tpu_custom_call.1} parent=11 // pred_check
          %p383 = pneg %p124
        $region22: #{tpu_custom_call.1} parent=11 // pred_check_branch
          %385 = sbr.rel (%p383) target = $region24
        $region23: #{tpu_custom_call.1} parent=11 // pred_region
          _
        $region24: #{tpu_custom_call.1} parent=11 // pred_fallthru
          _
        // Predicated region
        $region25: #{tpu_custom_call.1} parent=11 // pred_check
          %p386 = pneg %p145
        $region26: #{tpu_custom_call.1} parent=11 // pred_check_branch
          %388 = sbr.rel (%p386) target = $region28
        $region27: #{tpu_custom_call.1} parent=11 // pred_region
          _
        $region28: #{tpu_custom_call.1} parent=11 // pred_fallthru
          _
        // Predicated region
        $region29: #{tpu_custom_call.1} parent=11 // pred_check
          %p389 = pneg %p166
        $region30: #{tpu_custom_call.1} parent=11 // pred_check_branch
          %391 = sbr.rel (%p389) target = $region32
        $region31: #{tpu_custom_call.1} parent=11 // pred_region
          _
        $region32: #{tpu_custom_call.1} parent=11 // pred_fallthru
          _
        // Predicated region
        $region33: #{tpu_custom_call.1} parent=11 // pred_check
          %p392 = pneg %p187
        $region34: #{tpu_custom_call.1} parent=11 // pred_check_branch
          %394 = sbr.rel (%p392) target = $region36
        $region35: #{tpu_custom_call.1} parent=11 // pred_region
          _
        $region36: #{tpu_custom_call.1} parent=11 // pred_fallthru
          _
        // Predicated region
        $region37: #{tpu_custom_call.1} parent=11 // pred_check
          %p395 = pneg %p208
        $region38: #{tpu_custom_call.1} parent=11 // pred_check_branch
          %397 = sbr.rel (%p395) target = $region40
        $region39: #{tpu_custom_call.1} parent=11 // pred_region
          _
        $region40: #{tpu_custom_call.1} parent=11 // pred_fallthru
          _
        // Predicated region
        $region41: #{tpu_custom_call.1} parent=11 // pred_check
          %p398 = pneg %p229
        $region42: #{tpu_custom_call.1} parent=11 // pred_check_branch
          %400 = sbr.rel (%p398) target = $region44
        $region43: #{tpu_custom_call.1} parent=11 // pred_region
          _
        $region44: #{tpu_custom_call.1} parent=11 // pred_fallthru
          _
        // Predicated region
        $region45: #{tpu_custom_call.1} parent=11 // pred_check
          %p401 = pneg %p250
        $region46: #{tpu_custom_call.1} parent=11 // pred_check_branch
          %403 = sbr.rel (%p401) target = $region48
        $region47: #{tpu_custom_call.1} parent=11 // pred_region
          _
        $region48: #{tpu_custom_call.1} parent=11 // pred_fallthru
          _
        // Predicated region
        $region49: #{tpu_custom_call.1} parent=11 // pred_check
          %p404 = pneg %p271
        $region50: #{tpu_custom_call.1} parent=11 // pred_check_branch
          %406 = sbr.rel (%p404) target = $region52
        $region51: #{tpu_custom_call.1} parent=11 // pred_region
          _
        $region52: #{tpu_custom_call.1} parent=11 // pred_fallthru
          _
        // Predicated region
        $region53: #{tpu_custom_call.1} parent=11 // pred_check
          %p407 = pneg %p292
        $region54: #{tpu_custom_call.1} parent=11 // pred_check_branch
          %409 = sbr.rel (%p407) target = $region56
        $region55: #{tpu_custom_call.1} parent=11 // pred_region
          _
        $region56: #{tpu_custom_call.1} parent=11 // pred_fallthru
          _
        // Predicated region
        $region57: #{tpu_custom_call.1} parent=11 // pred_check
          %p410 = pneg %p313
        $region58: #{tpu_custom_call.1} parent=11 // pred_check_branch
          %412 = sbr.rel (%p410) target = $region60
        $region59: #{tpu_custom_call.1} parent=11 // pred_region
          _
        $region60: #{tpu_custom_call.1} parent=11 // pred_fallthru
          _
        // Predicated region
        $region61: #{tpu_custom_call.1} parent=11 // pred_check
          %p413 = pneg %p334
        $region62: #{tpu_custom_call.1} parent=11 // pred_check_branch
          %415 = sbr.rel (%p413) target = $region64
        $region63: #{tpu_custom_call.1} parent=11 // pred_region
          _
        $region64: #{tpu_custom_call.1} parent=11 // pred_fallthru
          _
      $region12: #{tpu_custom_call.1} parent=5 // pred_fallthru
        _
      %p416 = scmp.lt.s32.totalorder %s23, 2
      // Predicated region
      $region65: #{tpu_custom_call.1} parent=5 // pred_check
        %p417 = pneg %p416
      $region66: #{tpu_custom_call.1} parent=5 // pred_check_branch
        %419 = sbr.rel (%p417) target = $region68
      $region67: #{tpu_custom_call.1} parent=5 // pred_region
        // Predicated region
        $region69: #{tpu_custom_call.1} parent=67 // pred_check
          %p420 = pneg %p55
        $region70: #{tpu_custom_call.1} parent=67 // pred_check_branch
          %422 = sbr.rel (%p420) target = $region72
        $region71: #{tpu_custom_call.1} parent=67 // pred_region
          %p423 = scmp.lt.s32.totalorder %s30, 1
          %s424 = scalar_select %p423, %s30, 1
          %s425 = smul.addr %s424, 8
          %s426 = scalar_lea.vmem %s0, %s425
        $region72: #{tpu_custom_call.1} parent=67 // pred_fallthru
          _
      $region68: #{tpu_custom_call.1} parent=5 // pred_fallthru
        _
      %p427 = scmp.le.s32.totalorder 1, %s23
      %p428 = scmp.lt.s32.totalorder %s23, 3
      %p429 = pnand %p427, %p428
      %p430 = pneg %p429
      // Predicated region
      $region73: #{tpu_custom_call.1} parent=5 // pred_check
        _
      $region74: #{tpu_custom_call.1} parent=5 // pred_check_branch
        %432 = sbr.rel (%p429) target = $region76
      $region75: #{tpu_custom_call.1} parent=5 // pred_region
        %s433 = ssub.s32 %s23, 1
        %p434 = scmp.lt.s32.totalorder %s32, 1
        %s435 = scalar_select %p434, %s32, 1
        %s436 = smul.addr %s435, 8
        %s437 = scalar_lea.vmem %s0, %s436
        %p438 = pneg %p61
        %p439 = pneg %p58
        %p440 = pneg %p82
        %p441 = pneg %p79
        %p442 = pneg %p103
        %p443 = pneg %p100
        %p444 = pneg %p124
        %p445 = pneg %p121
        %p446 = pneg %p145
        %p447 = pneg %p142
        %p448 = pneg %p166
        %p449 = pneg %p163
        %p450 = pneg %p187
        %p451 = pneg %p184
        %p452 = pneg %p208
        %p453 = pneg %p205
        %p454 = pneg %p229
        %p455 = pneg %p226
        %p456 = pneg %p250
        %p457 = pneg %p247
        %p458 = pneg %p271
        %p459 = pneg %p268
        %p460 = pneg %p292
        %p461 = pneg %p289
        %p462 = pneg %p313
        %p463 = pneg %p310
        %p464 = pneg %p334
        %p465 = pneg %p331
        %p466 = pneg %p362
        %p467 = pneg %p359
        %s468 = sand.u32 %s349, 1
        %s469 = scalar_lea.sflag [#allocation5], %s468
        %s470 = sand.u32 %s349, 1
        %s471 = smul.addr %s470, 8
        %s472 = scalar_lea.vmem [#allocation4], %s471
        %p473 = scmp.lt.s32.totalorder %s32, 1
        %s474 = scalar_select %p473, %s32, 1
        %s475 = smul.addr %s474, 8
        %s476 = scalar_lea.vmem %s0, %s475
        %p478 = scmp.eq.s32.totalorder %s33, 0
        // Predicated region
        $region77: #{tpu_custom_call.1} parent=75 // pred_check
          %p479 = pneg %p478
        $region78: #{tpu_custom_call.1} parent=75 // pred_check_branch
          %481 = sbr.rel (%p479) target = $region80
        $region79: #{tpu_custom_call.1} parent=75 // pred_region
          %v482 = vld [vmem:[%s476] sm:$0xff]
          %v483 = vpack.c.bf16 %v482, %v482
          %v484 = vld [vmem:[%s2] sm:$0xf]
          %v485 = vld [vmem:[%s2 + $0x4] sm:$0xf]
          %v486 = vld [vmem:[%s2 + $0x8] sm:$0xf]
          %v487 = vld [vmem:[%s2 + $0xc] sm:$0xf]
          %v492 = vunpack.c.l.b16 %v484
          %v493 = vunpack.c.l.b16 %v485
          %v494 = vunpack.c.l.b16 %v486
          %v495 = vunpack.c.l.b16 %v487
          %v496 = vpack.c.b16 %v493, %v492
          %v497 = vpack.c.b16 %v495, %v494
          %vm500 = vcmask 261120
          %v502 = vsel %vm500, %v483, 0
          %504 = vmatprep.subr.bf16.mxu0 0
          %505 = vmatpush1.bf16.msra.mxu0 %v496
          %506 = vmatprep.subr.bf16.mxu0 0
          %507 = vmatpush1.bf16.msra.mxu0 %v497
          %508 = vmatprep.subr.bf16.mxu0 0
          %509 = vmatpush1.bf16.msra.mxu0 0
          %510 = vmatprep.subr.bf16.mxu0 0
          %511 = vmatpush1.bf16.msra.mxu0 0
          %512 = vmatprep.subr.bf16.mxu0 0
          %513 = vmatpush1.bf16.msra.mxu0 0
          %514 = vmatprep.subr.bf16.mxu0 0
          %515 = vmatpush1.bf16.msra.mxu0 0
          %516 = vmatprep.subr.bf16.mxu0 0
          %517 = vmatpush1.bf16.msra.mxu0 0
          %518 = vmatprep.subr.bf16.mxu0 0
          %519 = vmatpush1.bf16.msra.mxu0 0
          %520 = vmatprep.subr.bf16.mxu0 0
          %521 = vmatpush1.bf16.msra.mxu0 0
          %522 = vmatprep.subr.bf16.mxu0 0
          %523 = vmatpush1.bf16.msra.mxu0 0
          %524 = vmatprep.subr.bf16.mxu0 0
          %525 = vmatpush1.bf16.msra.mxu0 0
          %526 = vmatprep.subr.bf16.mxu0 0
          %527 = vmatpush1.bf16.msra.mxu0 0
          %528 = vmatprep.subr.bf16.mxu0 0
          %529 = vmatpush1.bf16.msra.mxu0 0
          %530 = vmatprep.subr.bf16.mxu0 0
          %531 = vmatpush1.bf16.msra.mxu0 0
          %532 = vmatprep.subr.bf16.mxu0 0
          %533 = vmatpush1.bf16.msra.mxu0 0
          %534 = vmatprep.subr.bf16.mxu0 0
          %535 = vmatpush1.bf16.msra.mxu0 0
          %536 = vmatprep.mubr.bf16.mxu0 0
          %537 = vmatmul.mubr.bf16.gmra.mrb[0].mxu0 %v502
          %v538 = vpop.f32.mrb[0].mxu0
          %v539 = vadd.f32 0.0, %v538
          %v540 = vpop.f32.mrb[0].mxu0
          %v541 = vpop.f32.mrb[0].mxu0
          %v542 = vpop.f32.mrb[0].mxu0
          %543 = vdwg.mxu0
          %v544 = vpack.c.bf16 %v539, %v539
          %vm545 = vcmask 60416
          %546 = vst.msk [vmem:[#allocation2] sm:$0xf] %vm545, %v544
          %v547 = vld [vmem:[%s3] sm:$0xf]
          %v548 = vld [vmem:[%s3 + $0x4] sm:$0xf]
          %v549 = vld [vmem:[%s3 + $0x8] sm:$0xf]
          %v550 = vld [vmem:[%s3 + $0xc] sm:$0xf]
          %v555 = vunpack.c.l.b16 %v547
          %v556 = vunpack.c.l.b16 %v548
          %v557 = vunpack.c.l.b16 %v549
          %v558 = vunpack.c.l.b16 %v550
          %v559 = vpack.c.b16 %v556, %v555
          %v560 = vpack.c.b16 %v558, %v557
          %563 = vmatprep.subr.bf16.mxu0 0
          %564 = vmatpush1.bf16.msra.mxu0 %v559
          %565 = vmatprep.subr.bf16.mxu0 0
          %566 = vmatpush1.bf16.msra.mxu0 %v560
          %567 = vmatprep.subr.bf16.mxu0 0
          %568 = vmatpush1.bf16.msra.mxu0 0
          %569 = vmatprep.subr.bf16.mxu0 0
          %570 = vmatpush1.bf16.msra.mxu0 0
          %571 = vmatprep.subr.bf16.mxu0 0
          %572 = vmatpush1.bf16.msra.mxu0 0
          %573 = vmatprep.subr.bf16.mxu0 0
          %574 = vmatpush1.bf16.msra.mxu0 0
          %575 = vmatprep.subr.bf16.mxu0 0
          %576 = vmatpush1.bf16.msra.mxu0 0
          %577 = vmatprep.subr.bf16.mxu0 0
          %578 = vmatpush1.bf16.msra.mxu0 0
          %579 = vmatprep.subr.bf16.mxu0 0
          %580 = vmatpush1.bf16.msra.mxu0 0
          %581 = vmatprep.subr.bf16.mxu0 0
          %582 = vmatpush1.bf16.msra.mxu0 0
          %583 = vmatprep.subr.bf16.mxu0 0
          %584 = vmatpush1.bf16.msra.mxu0 0
          %585 = vmatprep.subr.bf16.mxu0 0
          %586 = vmatpush1.bf16.msra.mxu0 0
          %587 = vmatprep.subr.bf16.mxu0 0
          %588 = vmatpush1.bf16.msra.mxu0 0
          %589 = vmatprep.subr.bf16.mxu0 0
          %590 = vmatpush1.bf16.msra.mxu0 0
          %591 = vmatprep.subr.bf16.mxu0 0
          %592 = vmatpush1.bf16.msra.mxu0 0
          %593 = vmatprep.subr.bf16.mxu0 0
          %594 = vmatpush1.bf16.msra.mxu0 0
          %595 = vmatprep.mubr.bf16.mxu0 0
          %596 = vmatmul.mubr.bf16.gmra.mrb[0].mxu0 %v502
          %v597 = vpop.f32.mrb[0].mxu0
          %v598 = vadd.f32 0.0, %v597
          %v599 = vpop.f32.mrb[0].mxu0
          %v600 = vpop.f32.mrb[0].mxu0
          %v601 = vpop.f32.mrb[0].mxu0
          %602 = vdwg.mxu0
          %v603 = vpack.c.bf16 %v598, %v598
          %604 = vst.msk [vmem:[#allocation3] sm:$0xf] %vm545, %v603
          %s605 = scalar_lea.vmem %s2, 16
          %v606 = vld [vmem:[%s605] sm:$0xf]
          %v607 = vld [vmem:[%s605 + $0x4] sm:$0xf]
          %v608 = vld [vmem:[%s605 + $0x8] sm:$0xf]
          %v609 = vld [vmem:[%s605 + $0xc] sm:$0xf]
          %v614 = vunpack.c.l.b16 %v606
          %v615 = vunpack.c.l.b16 %v607
          %v616 = vunpack.c.l.b16 %v608
          %v617 = vunpack.c.l.b16 %v609
          %v618 = vpack.c.b16 %v615, %v614
          %v619 = vpack.c.b16 %v617, %v616
          %622 = vmatprep.subr.bf16.mxu0 0
          %623 = vmatpush1.bf16.msra.mxu0 %v618
          %624 = vmatprep.subr.bf16.mxu0 0
          %625 = vmatpush1.bf16.msra.mxu0 %v619
          %626 = vmatprep.subr.bf16.mxu0 0
          %627 = vmatpush1.bf16.msra.mxu0 0
          %628 = vmatprep.subr.bf16.mxu0 0
          %629 = vmatpush1.bf16.msra.mxu0 0
          %630 = vmatprep.subr.bf16.mxu0 0
          %631 = vmatpush1.bf16.msra.mxu0 0
          %632 = vmatprep.subr.bf16.mxu0 0
          %633 = vmatpush1.bf16.msra.mxu0 0
          %634 = vmatprep.subr.bf16.mxu0 0
          %635 = vmatpush1.bf16.msra.mxu0 0
          %636 = vmatprep.subr.bf16.mxu0 0
          %637 = vmatpush1.bf16.msra.mxu0 0
          %638 = vmatprep.subr.bf16.mxu0 0
          %639 = vmatpush1.bf16.msra.mxu0 0
          %640 = vmatprep.subr.bf16.mxu0 0
          %641 = vmatpush1.bf16.msra.mxu0 0
          %642 = vmatprep.subr.bf16.mxu0 0
          %643 = vmatpush1.bf16.msra.mxu0 0
          %644 = vmatprep.subr.bf16.mxu0 0
          %645 = vmatpush1.bf16.msra.mxu0 0
          %646 = vmatprep.subr.bf16.mxu0 0
          %647 = vmatpush1.bf16.msra.mxu0 0
          %648 = vmatprep.subr.bf16.mxu0 0
          %649 = vmatpush1.bf16.msra.mxu0 0
          %650 = vmatprep.subr.bf16.mxu0 0
          %651 = vmatpush1.bf16.msra.mxu0 0
          %652 = vmatprep.subr.bf16.mxu0 0
          %653 = vmatpush1.bf16.msra.mxu0 0
          %654 = vmatprep.mubr.bf16.mxu0 0
          %655 = vmatmul.mubr.bf16.gmra.mrb[0].mxu0 %v502
          %v656 = vpop.f32.mrb[0].mxu0
          %v657 = vadd.f32 0.0, %v656
          %v658 = vpop.f32.mrb[0].mxu0
          %v659 = vpop.f32.mrb[0].mxu0
          %v660 = vpop.f32.mrb[0].mxu0
          %661 = vdwg.mxu0
          %v662 = vpack.c.bf16 %v657, %v657
          %s663 = scalar_lea.vmem [#allocation2], 4
          %664 = vst.msk [vmem:[%s663] sm:$0xf] %vm545, %v662
          %s665 = scalar_lea.vmem %s3, 16
          %v666 = vld [vmem:[%s665] sm:$0xf]
          %v667 = vld [vmem:[%s665 + $0x4] sm:$0xf]
          %v668 = vld [vmem:[%s665 + $0x8] sm:$0xf]
          %v669 = vld [vmem:[%s665 + $0xc] sm:$0xf]
          %v674 = vunpack.c.l.b16 %v666
          %v675 = vunpack.c.l.b16 %v667
          %v676 = vunpack.c.l.b16 %v668
          %v677 = vunpack.c.l.b16 %v669
          %v678 = vpack.c.b16 %v675, %v674
          %v679 = vpack.c.b16 %v677, %v676
          %682 = vmatprep.subr.bf16.mxu0 0
          %683 = vmatpush1.bf16.msra.mxu0 %v678
          %684 = vmatprep.subr.bf16.mxu0 0
          %685 = vmatpush1.bf16.msra.mxu0 %v679
          %686 = vmatprep.subr.bf16.mxu0 0
          %687 = vmatpush1.bf16.msra.mxu0 0
          %688 = vmatprep.subr.bf16.mxu0 0
          %689 = vmatpush1.bf16.msra.mxu0 0
          %690 = vmatprep.subr.bf16.mxu0 0
          %691 = vmatpush1.bf16.msra.mxu0 0
          %692 = vmatprep.subr.bf16.mxu0 0
          %693 = vmatpush1.bf16.msra.mxu0 0
          %694 = vmatprep.subr.bf16.mxu0 0
          %695 = vmatpush1.bf16.msra.mxu0 0
          %696 = vmatprep.subr.bf16.mxu0 0
          %697 = vmatpush1.bf16.msra.mxu0 0
          %698 = vmatprep.subr.bf16.mxu0 0
          %699 = vmatpush1.bf16.msra.mxu0 0
          %700 = vmatprep.subr.bf16.mxu0 0
          %701 = vmatpush1.bf16.msra.mxu0 0
          %702 = vmatprep.subr.bf16.mxu0 0
          %703 = vmatpush1.bf16.msra.mxu0 0
          %704 = vmatprep.subr.bf16.mxu0 0
          %705 = vmatpush1.bf16.msra.mxu0 0
          %706 = vmatprep.subr.bf16.mxu0 0
          %707 = vmatpush1.bf16.msra.mxu0 0
          %708 = vmatprep.subr.bf16.mxu0 0
          %709 = vmatpush1.bf16.msra.mxu0 0
          %710 = vmatprep.subr.bf16.mxu0 0
          %711 = vmatpush1.bf16.msra.mxu0 0
          %712 = vmatprep.subr.bf16.mxu0 0
          %713 = vmatpush1.bf16.msra.mxu0 0
          %714 = vmatprep.mubr.bf16.mxu0 0
          %715 = vmatmul.mubr.bf16.gmra.mrb[0].mxu0 %v502
          %v716 = vpop.f32.mrb[0].mxu0
          %v717 = vadd.f32 0.0, %v716
          %v718 = vpop.f32.mrb[0].mxu0
          %v719 = vpop.f32.mrb[0].mxu0
          %v720 = vpop.f32.mrb[0].mxu0
          %721 = vdwg.mxu0
          %v722 = vpack.c.bf16 %v717, %v717
          %s723 = scalar_lea.vmem [#allocation3], 4
          %724 = vst.msk [vmem:[%s723] sm:$0xf] %vm545, %v722
          %s725 = scalar_lea.vmem %s2, 32
          %v726 = vld [vmem:[%s725] sm:$0xf]
          %v727 = vld [vmem:[%s725 + $0x4] sm:$0xf]
          %v728 = vld [vmem:[%s725 + $0x8] sm:$0xf]
          %v729 = vld [vmem:[%s725 + $0xc] sm:$0xf]
          %v734 = vunpack.c.l.b16 %v726
          %v735 = vunpack.c.l.b16 %v727
          %v736 = vunpack.c.l.b16 %v728
          %v737 = vunpack.c.l.b16 %v729
          %v738 = vpack.c.b16 %v735, %v734
          %v739 = vpack.c.b16 %v737, %v736
          %742 = vmatprep.subr.bf16.mxu0 0
          %743 = vmatpush1.bf16.msra.mxu0 %v738
          %744 = vmatprep.subr.bf16.mxu0 0
          %745 = vmatpush1.bf16.msra.mxu0 %v739
          %746 = vmatprep.subr.bf16.mxu0 0
          %747 = vmatpush1.bf16.msra.mxu0 0
          %748 = vmatprep.subr.bf16.mxu0 0
          %749 = vmatpush1.bf16.msra.mxu0 0
          %750 = vmatprep.subr.bf16.mxu0 0
          %751 = vmatpush1.bf16.msra.mxu0 0
          %752 = vmatprep.subr.bf16.mxu0 0
          %753 = vmatpush1.bf16.msra.mxu0 0
          %754 = vmatprep.subr.bf16.mxu0 0
          %755 = vmatpush1.bf16.msra.mxu0 0
          %756 = vmatprep.subr.bf16.mxu0 0
          %757 = vmatpush1.bf16.msra.mxu0 0
          %758 = vmatprep.subr.bf16.mxu0 0
          %759 = vmatpush1.bf16.msra.mxu0 0
          %760 = vmatprep.subr.bf16.mxu0 0
          %761 = vmatpush1.bf16.msra.mxu0 0
          %762 = vmatprep.subr.bf16.mxu0 0
          %763 = vmatpush1.bf16.msra.mxu0 0
          %764 = vmatprep.subr.bf16.mxu0 0
          %765 = vmatpush1.bf16.msra.mxu0 0
          %766 = vmatprep.subr.bf16.mxu0 0
          %767 = vmatpush1.bf16.msra.mxu0 0
          %768 = vmatprep.subr.bf16.mxu0 0
          %769 = vmatpush1.bf16.msra.mxu0 0
          %770 = vmatprep.subr.bf16.mxu0 0
          %771 = vmatpush1.bf16.msra.mxu0 0
          %772 = vmatprep.subr.bf16.mxu0 0
          %773 = vmatpush1.bf16.msra.mxu0 0
          %774 = vmatprep.mubr.bf16.mxu0 0
          %775 = vmatmul.mubr.bf16.gmra.mrb[0].mxu0 %v502
          %v776 = vpop.f32.mrb[0].mxu0
          %v777 = vadd.f32 0.0, %v776
          %v778 = vpop.f32.mrb[0].mxu0
          %v779 = vpop.f32.mrb[0].mxu0
          %v780 = vpop.f32.mrb[0].mxu0
          %781 = vdwg.mxu0
          %v782 = vpack.c.bf16 %v777, %v777
          %s783 = scalar_lea.vmem [#allocation2], 8
          %784 = vst.msk [vmem:[%s783] sm:$0xf] %vm545, %v782
          %s785 = scalar_lea.vmem %s3, 32
          %v786 = vld [vmem:[%s785] sm:$0xf]
          %v787 = vld [vmem:[%s785 + $0x4] sm:$0xf]
          %v788 = vld [vmem:[%s785 + $0x8] sm:$0xf]
          %v789 = vld [vmem:[%s785 + $0xc] sm:$0xf]
          %v794 = vunpack.c.l.b16 %v786
          %v795 = vunpack.c.l.b16 %v787
          %v796 = vunpack.c.l.b16 %v788
          %v797 = vunpack.c.l.b16 %v789
          %v798 = vpack.c.b16 %v795, %v794
          %v799 = vpack.c.b16 %v797, %v796
          %802 = vmatprep.subr.bf16.mxu0 0
          %803 = vmatpush1.bf16.msra.mxu0 %v798
          %804 = vmatprep.subr.bf16.mxu0 0
          %805 = vmatpush1.bf16.msra.mxu0 %v799
          %806 = vmatprep.subr.bf16.mxu0 0
          %807 = vmatpush1.bf16.msra.mxu0 0
          %808 = vmatprep.subr.bf16.mxu0 0
          %809 = vmatpush1.bf16.msra.mxu0 0
          %810 = vmatprep.subr.bf16.mxu0 0
          %811 = vmatpush1.bf16.msra.mxu0 0
          %812 = vmatprep.subr.bf16.mxu0 0
          %813 = vmatpush1.bf16.msra.mxu0 0
          %814 = vmatprep.subr.bf16.mxu0 0
          %815 = vmatpush1.bf16.msra.mxu0 0
          %816 = vmatprep.subr.bf16.mxu0 0
          %817 = vmatpush1.bf16.msra.mxu0 0
          %818 = vmatprep.subr.bf16.mxu0 0
          %819 = vmatpush1.bf16.msra.mxu0 0
          %820 = vmatprep.subr.bf16.mxu0 0
          %821 = vmatpush1.bf16.msra.mxu0 0
          %822 = vmatprep.subr.bf16.mxu0 0
          %823 = vmatpush1.bf16.msra.mxu0 0
          %824 = vmatprep.subr.bf16.mxu0 0
          %825 = vmatpush1.bf16.msra.mxu0 0
          %826 = vmatprep.subr.bf16.mxu0 0
          %827 = vmatpush1.bf16.msra.mxu0 0
          %828 = vmatprep.subr.bf16.mxu0 0
          %829 = vmatpush1.bf16.msra.mxu0 0
          %830 = vmatprep.subr.bf16.mxu0 0
          %831 = vmatpush1.bf16.msra.mxu0 0
          %832 = vmatprep.subr.bf16.mxu0 0
          %833 = vmatpush1.bf16.msra.mxu0 0
          %834 = vmatprep.mubr.bf16.mxu0 0
          %835 = vmatmul.mubr.bf16.gmra.mrb[0].mxu0 %v502
          %v836 = vpop.f32.mrb[0].mxu0
          %v837 = vadd.f32 0.0, %v836
          %v838 = vpop.f32.mrb[0].mxu0
          %v839 = vpop.f32.mrb[0].mxu0
          %v840 = vpop.f32.mrb[0].mxu0
          %841 = vdwg.mxu0
          %v842 = vpack.c.bf16 %v837, %v837
          %s843 = scalar_lea.vmem [#allocation3], 8
          %844 = vst.msk [vmem:[%s843] sm:$0xf] %vm545, %v842
          %s845 = scalar_lea.vmem %s2, 48
          %v846 = vld [vmem:[%s845] sm:$0xf]
          %v847 = vld [vmem:[%s845 + $0x4] sm:$0xf]
          %v848 = vld [vmem:[%s845 + $0x8] sm:$0xf]
          %v849 = vld [vmem:[%s845 + $0xc] sm:$0xf]
          %v854 = vunpack.c.l.b16 %v846
          %v855 = vunpack.c.l.b16 %v847
          %v856 = vunpack.c.l.b16 %v848
          %v857 = vunpack.c.l.b16 %v849
          %v858 = vpack.c.b16 %v855, %v854
          %v859 = vpack.c.b16 %v857, %v856
          %862 = vmatprep.subr.bf16.mxu0 0
          %863 = vmatpush1.bf16.msra.mxu0 %v858
          %864 = vmatprep.subr.bf16.mxu0 0
          %865 = vmatpush1.bf16.msra.mxu0 %v859
          %866 = vmatprep.subr.bf16.mxu0 0
          %867 = vmatpush1.bf16.msra.mxu0 0
          %868 = vmatprep.subr.bf16.mxu0 0
          %869 = vmatpush1.bf16.msra.mxu0 0
          %870 = vmatprep.subr.bf16.mxu0 0
          %871 = vmatpush1.bf16.msra.mxu0 0
          %872 = vmatprep.subr.bf16.mxu0 0
          %873 = vmatpush1.bf16.msra.mxu0 0
          %874 = vmatprep.subr.bf16.mxu0 0
          %875 = vmatpush1.bf16.msra.mxu0 0
          %876 = vmatprep.subr.bf16.mxu0 0
          %877 = vmatpush1.bf16.msra.mxu0 0
          %878 = vmatprep.subr.bf16.mxu0 0
          %879 = vmatpush1.bf16.msra.mxu0 0
          %880 = vmatprep.subr.bf16.mxu0 0
          %881 = vmatpush1.bf16.msra.mxu0 0
          %882 = vmatprep.subr.bf16.mxu0 0
          %883 = vmatpush1.bf16.msra.mxu0 0
          %884 = vmatprep.subr.bf16.mxu0 0
          %885 = vmatpush1.bf16.msra.mxu0 0
          %886 = vmatprep.subr.bf16.mxu0 0
          %887 = vmatpush1.bf16.msra.mxu0 0
          %888 = vmatprep.subr.bf16.mxu0 0
          %889 = vmatpush1.bf16.msra.mxu0 0
          %890 = vmatprep.subr.bf16.mxu0 0
          %891 = vmatpush1.bf16.msra.mxu0 0
          %892 = vmatprep.subr.bf16.mxu0 0
          %893 = vmatpush1.bf16.msra.mxu0 0
          %894 = vmatprep.mubr.bf16.mxu0 0
          %895 = vmatmul.mubr.bf16.gmra.mrb[0].mxu0 %v502
          %v896 = vpop.f32.mrb[0].mxu0
          %v897 = vadd.f32 0.0, %v896
          %v898 = vpop.f32.mrb[0].mxu0
          %v899 = vpop.f32.mrb[0].mxu0
          %v900 = vpop.f32.mrb[0].mxu0
          %901 = vdwg.mxu0
          %v902 = vpack.c.bf16 %v897, %v897
          %s903 = scalar_lea.vmem [#allocation2], 12
          %904 = vst.msk [vmem:[%s903] sm:$0xf] %vm545, %v902
          %s905 = scalar_lea.vmem %s3, 48
          %v906 = vld [vmem:[%s905] sm:$0xf]
          %v907 = vld [vmem:[%s905 + $0x4] sm:$0xf]
          %v908 = vld [vmem:[%s905 + $0x8] sm:$0xf]
          %v909 = vld [vmem:[%s905 + $0xc] sm:$0xf]
          %v914 = vunpack.c.l.b16 %v906
          %v915 = vunpack.c.l.b16 %v907
          %v916 = vunpack.c.l.b16 %v908
          %v917 = vunpack.c.l.b16 %v909
          %v918 = vpack.c.b16 %v915, %v914
          %v919 = vpack.c.b16 %v917, %v916
          %922 = vmatprep.subr.bf16.mxu0 0
          %923 = vmatpush1.bf16.msra.mxu0 %v918
          %924 = vmatprep.subr.bf16.mxu0 0
          %925 = vmatpush1.bf16.msra.mxu0 %v919
          %926 = vmatprep.subr.bf16.mxu0 0
          %927 = vmatpush1.bf16.msra.mxu0 0
          %928 = vmatprep.subr.bf16.mxu0 0
          %929 = vmatpush1.bf16.msra.mxu0 0
          %930 = vmatprep.subr.bf16.mxu0 0
          %931 = vmatpush1.bf16.msra.mxu0 0
          %932 = vmatprep.subr.bf16.mxu0 0
          %933 = vmatpush1.bf16.msra.mxu0 0
          %934 = vmatprep.subr.bf16.mxu0 0
          %935 = vmatpush1.bf16.msra.mxu0 0
          %936 = vmatprep.subr.bf16.mxu0 0
          %937 = vmatpush1.bf16.msra.mxu0 0
          %938 = vmatprep.subr.bf16.mxu0 0
          %939 = vmatpush1.bf16.msra.mxu0 0
          %940 = vmatprep.subr.bf16.mxu0 0
          %941 = vmatpush1.bf16.msra.mxu0 0
          %942 = vmatprep.subr.bf16.mxu0 0
          %943 = vmatpush1.bf16.msra.mxu0 0
          %944 = vmatprep.subr.bf16.mxu0 0
          %945 = vmatpush1.bf16.msra.mxu0 0
          %946 = vmatprep.subr.bf16.mxu0 0
          %947 = vmatpush1.bf16.msra.mxu0 0
          %948 = vmatprep.subr.bf16.mxu0 0
          %949 = vmatpush1.bf16.msra.mxu0 0
          %950 = vmatprep.subr.bf16.mxu0 0
          %951 = vmatpush1.bf16.msra.mxu0 0
          %952 = vmatprep.subr.bf16.mxu0 0
          %953 = vmatpush1.bf16.msra.mxu0 0
          %954 = vmatprep.mubr.bf16.mxu0 0
          %955 = vmatmul.mubr.bf16.gmra.mrb[0].mxu0 %v502
          %v956 = vpop.f32.mrb[0].mxu0
          %v957 = vadd.f32 0.0, %v956
          %v958 = vpop.f32.mrb[0].mxu0
          %v959 = vpop.f32.mrb[0].mxu0
          %v960 = vpop.f32.mrb[0].mxu0
          %961 = vdwg.mxu0
          %v962 = vpack.c.bf16 %v957, %v957
          %s963 = scalar_lea.vmem [#allocation3], 12
          %964 = vst.msk [vmem:[%s963] sm:$0xf] %vm545, %v962
        $region80: #{tpu_custom_call.1} parent=75 // pred_fallthru
          _
        %s965 = smul.u32 %s33, 8
        %s966 = scalar_lea.vmem %s476, %s965
        %v967 = vld [vmem:[%s966] sm:$0xff]
        %v968 = vpack.c.bf16 %v967, %v967
        %v969 = vld [vmem:[%s1] sm:$0xf]
        %v970 = vld [vmem:[%s1 + $0x4] sm:$0xf]
        %v971 = vld [vmem:[%s1 + $0x8] sm:$0xf]
        %v972 = vld [vmem:[%s1 + $0xc] sm:$0xf]
        %v977 = vunpack.c.l.b16 %v969
        %v978 = vunpack.c.l.b16 %v970
        %v979 = vunpack.c.l.b16 %v971
        %v980 = vunpack.c.l.b16 %v972
        %v981 = vpack.c.b16 %v978, %v977
        %v982 = vpack.c.b16 %v980, %v979
        %vm985 = vcmask 261120
        %v987 = vsel %vm985, %v968, 0
        %989 = vmatprep.subr.bf16.mxu0 0
        %990 = vmatpush1.bf16.msra.mxu0 %v981
        %991 = vmatprep.subr.bf16.mxu0 0
        %992 = vmatpush1.bf16.msra.mxu0 %v982
        %993 = vmatprep.subr.bf16.mxu0 0
        %994 = vmatpush1.bf16.msra.mxu0 0
        %995 = vmatprep.subr.bf16.mxu0 0
        %996 = vmatpush1.bf16.msra.mxu0 0
        %997 = vmatprep.subr.bf16.mxu0 0
        %998 = vmatpush1.bf16.msra.mxu0 0
        %999 = vmatprep.subr.bf16.mxu0 0
        %1000 = vmatpush1.bf16.msra.mxu0 0
        %1001 = vmatprep.subr.bf16.mxu0 0
        %1002 = vmatpush1.bf16.msra.mxu0 0
        %1003 = vmatprep.subr.bf16.mxu0 0
        %1004 = vmatpush1.bf16.msra.mxu0 0
        %1005 = vmatprep.subr.bf16.mxu0 0
        %1006 = vmatpush1.bf16.msra.mxu0 0
        %1007 = vmatprep.subr.bf16.mxu0 0
        %1008 = vmatpush1.bf16.msra.mxu0 0
        %1009 = vmatprep.subr.bf16.mxu0 0
        %1010 = vmatpush1.bf16.msra.mxu0 0
        %1011 = vmatprep.subr.bf16.mxu0 0
        %1012 = vmatpush1.bf16.msra.mxu0 0
        %1013 = vmatprep.subr.bf16.mxu0 0
        %1014 = vmatpush1.bf16.msra.mxu0 0
        %1015 = vmatprep.subr.bf16.mxu0 0
        %1016 = vmatpush1.bf16.msra.mxu0 0
        %1017 = vmatprep.subr.bf16.mxu0 0
        %1018 = vmatpush1.bf16.msra.mxu0 0
        %1019 = vmatprep.subr.bf16.mxu0 0
        %1020 = vmatpush1.bf16.msra.mxu0 0
        %1021 = vmatprep.mubr.bf16.mxu0 0
        %1022 = vmatmul.mubr.bf16.gmra.mrb[0].mxu0 %v987
        %v1023 = vpop.f32.mrb[0].mxu0
        %v1024 = vadd.f32 0.0, %v1023
        %v1025 = vpop.f32.mrb[0].mxu0
        %v1026 = vpop.f32.mrb[0].mxu0
        %v1027 = vpop.f32.mrb[0].mxu0
        %1028 = vdwg.mxu0
        %v1029 = vpack.c.bf16 %v1024, %v1024
        %v1030 = vld [vmem:[#allocation2] sm:$0xf]
        %vm1031 = vcmask 64512
        %v1033 = vsel %vm1031, %v1029, 0
        %v1036 = vsel %vm1031, %v1030, 0
        %1038 = vmatprep.subr.bf16.mxu0 0
        %1039 = vmatpush1.bf16.xpose.msra.mxu0 %v1036
        %1040 = vmatprep.subr.bf16.mxu0 0
        %1041 = vmatpush1.bf16.xpose.msra.mxu0 0
        %1042 = vmatprep.subr.bf16.mxu0 0
        %1043 = vmatpush1.bf16.xpose.msra.mxu0 0
        %1044 = vmatprep.subr.bf16.mxu0 0
        %1045 = vmatpush1.bf16.xpose.msra.mxu0 0
        %1046 = vmatprep.subr.bf16.mxu0 0
        %1047 = vmatpush1.bf16.xpose.msra.mxu0 0
        %1048 = vmatprep.subr.bf16.mxu0 0
        %1049 = vmatpush1.bf16.xpose.msra.mxu0 0
        %1050 = vmatprep.subr.bf16.mxu0 0
        %1051 = vmatpush1.bf16.xpose.msra.mxu0 0
        %1052 = vmatprep.subr.bf16.mxu0 0
        %1053 = vmatpush1.bf16.xpose.msra.mxu0 0
        %1054 = vmatprep.subr.bf16.mxu0 0
        %1055 = vmatpush1.bf16.xpose.msra.mxu0 0
        %1056 = vmatprep.subr.bf16.mxu0 0
        %1057 = vmatpush1.bf16.xpose.msra.mxu0 0
        %1058 = vmatprep.subr.bf16.mxu0 0
        %1059 = vmatpush1.bf16.xpose.msra.mxu0 0
        %1060 = vmatprep.subr.bf16.mxu0 0
        %1061 = vmatpush1.bf16.xpose.msra.mxu0 0
        %1062 = vmatprep.subr.bf16.mxu0 0
        %1063 = vmatpush1.bf16.xpose.msra.mxu0 0
        %1064 = vmatprep.subr.bf16.mxu0 0
        %1065 = vmatpush1.bf16.xpose.msra.mxu0 0
        %1066 = vmatprep.subr.bf16.mxu0 0
        %1067 = vmatpush1.bf16.xpose.msra.mxu0 0
        %1068 = vmatprep.subr.bf16.mxu0 0
        %1069 = vmatpush1.bf16.xpose.msra.mxu0 0
        %1070 = vmatprep.mubr.bf16.mxu0 0
        %1071 = vmatmul.mubr.bf16.gmra.mrb[0].mxu0 %v1033
        %v1072 = vpop.f32.mrb[0].mxu0
        %v1073 = vadd.f32 0.0, %v1072
        %v1074 = vpop.f32.mrb[0].mxu0
        %v1075 = vpop.f32.mrb[0].mxu0
        %v1076 = vpop.f32.mrb[0].mxu0
        %1077 = vdwg.mxu0
        %v1078 = vsel %vm1031, %v1073, -inf
        %1079 = vmax.xlane.f32.xlu0 %v1078
        %v1080 = vpop.xlane.xlu0 %1079
        %v1081 = vsub.f32 %v1073, %v1080
        %v1082 = vmul.f32 %v1081, 1.442695
        %v1083 = vpow.pop %v1082
        %v1084 = vsel %vm1031, %v1083, 0.0
        %1085 = vadd.xlane.f32.xlu0 %v1084
        %v1086 = vpop.xlane.xlu0 %1085
        %v1087 = vrcp.pop %v1086
        %v1088 = vmul.f32 %v1083, %v1087
        %v1089 = vpack.c.bf16 %v1088, %v1088
        %v1090 = vld [vmem:[#allocation3] sm:$0xf]
        %v1092 = vsel %vm1031, %v1089, 0
        %vm1094 = vcmask 1043456
        %v1096 = vsel %vm1094, %v1090, 0
        %1098 = vmatprep.subr.bf16.mxu0 0
        %1099 = vmatpush1.bf16.msra.mxu0 %v1096
        %1100 = vmatprep.subr.bf16.mxu0 0
        %1101 = vmatpush1.bf16.msra.mxu0 0
        %1102 = vmatprep.subr.bf16.mxu0 0
        %1103 = vmatpush1.bf16.msra.mxu0 0
        %1104 = vmatprep.subr.bf16.mxu0 0
        %1105 = vmatpush1.bf16.msra.mxu0 0
        %1106 = vmatprep.subr.bf16.mxu0 0
        %1107 = vmatpush1.bf16.msra.mxu0 0
        %1108 = vmatprep.subr.bf16.mxu0 0
        %1109 = vmatpush1.bf16.msra.mxu0 0
        %1110 = vmatprep.subr.bf16.mxu0 0
        %1111 = vmatpush1.bf16.msra.mxu0 0
        %1112 = vmatprep.subr.bf16.mxu0 0
        %1113 = vmatpush1.bf16.msra.mxu0 0
        %1114 = vmatprep.subr.bf16.mxu0 0
        %1115 = vmatpush1.bf16.msra.mxu0 0
        %1116 = vmatprep.subr.bf16.mxu0 0
        %1117 = vmatpush1.bf16.msra.mxu0 0
        %1118 = vmatprep.subr.bf16.mxu0 0
        %1119 = vmatpush1.bf16.msra.mxu0 0
        %1120 = vmatprep.subr.bf16.mxu0 0
        %1121 = vmatpush1.bf16.msra.mxu0 0
        %1122 = vmatprep.subr.bf16.mxu0 0
        %1123 = vmatpush1.bf16.msra.mxu0 0
        %1124 = vmatprep.subr.bf16.mxu0 0
        %1125 = vmatpush1.bf16.msra.mxu0 0
        %1126 = vmatprep.subr.bf16.mxu0 0
        %1127 = vmatpush1.bf16.msra.mxu0 0
        %1128 = vmatprep.subr.bf16.mxu0 0
        %1129 = vmatpush1.bf16.msra.mxu0 0
        %1130 = vmatprep.mubr.bf16.mxu0 0
        %1131 = vmatmul.mubr.bf16.gmra.mrb[0].mxu0 %v1092
        %v1132 = vpop.f32.mrb[0].mxu0
        %v1133 = vadd.f32 0.0, %v1132
        %v1134 = vpop.f32.mrb[0].mxu0
        %v1135 = vpop.f32.mrb[0].mxu0
        %v1136 = vpop.f32.mrb[0].mxu0
        %1137 = vdwg.mxu0
        %v1138 = vpack.c.bf16 %v1133, %v1133
        %v1139 = vld [vmem:[%s4] sm:$0xf]
        %s1140 = scalar_lea.vmem %s1, 16
        %v1141 = vld [vmem:[%s1140] sm:$0xf]
        %v1142 = vld [vmem:[%s1140 + $0x4] sm:$0xf]
        %v1143 = vld [vmem:[%s1140 + $0x8] sm:$0xf]
        %v1144 = vld [vmem:[%s1140 + $0xc] sm:$0xf]
        %v1149 = vunpack.c.l.b16 %v1141
        %v1150 = vunpack.c.l.b16 %v1142
        %v1151 = vunpack.c.l.b16 %v1143
        %v1152 = vunpack.c.l.b16 %v1144
        %v1153 = vpack.c.b16 %v1150, %v1149
        %v1154 = vpack.c.b16 %v1152, %v1151
        %1157 = vmatprep.subr.bf16.mxu0 0
        %1158 = vmatpush1.bf16.msra.mxu0 %v1153
        %1159 = vmatprep.subr.bf16.mxu0 0
        %1160 = vmatpush1.bf16.msra.mxu0 %v1154
        %1161 = vmatprep.subr.bf16.mxu0 0
        %1162 = vmatpush1.bf16.msra.mxu0 0
        %1163 = vmatprep.subr.bf16.mxu0 0
        %1164 = vmatpush1.bf16.msra.mxu0 0
        %1165 = vmatprep.subr.bf16.mxu0 0
        %1166 = vmatpush1.bf16.msra.mxu0 0
        %1167 = vmatprep.subr.bf16.mxu0 0
        %1168 = vmatpush1.bf16.msra.mxu0 0
        %1169 = vmatprep.subr.bf16.mxu0 0
        %1170 = vmatpush1.bf16.msra.mxu0 0
        %1171 = vmatprep.subr.bf16.mxu0 0
        %1172 = vmatpush1.bf16.msra.mxu0 0
        %1173 = vmatprep.subr.bf16.mxu0 0
        %1174 = vmatpush1.bf16.msra.mxu0 0
        %1175 = vmatprep.subr.bf16.mxu0 0
        %1176 = vmatpush1.bf16.msra.mxu0 0
        %1177 = vmatprep.subr.bf16.mxu0 0
        %1178 = vmatpush1.bf16.msra.mxu0 0
        %1179 = vmatprep.subr.bf16.mxu0 0
        %1180 = vmatpush1.bf16.msra.mxu0 0
        %1181 = vmatprep.subr.bf16.mxu0 0
        %1182 = vmatpush1.bf16.msra.mxu0 0
        %1183 = vmatprep.subr.bf16.mxu0 0
        %1184 = vmatpush1.bf16.msra.mxu0 0
        %1185 = vmatprep.subr.bf16.mxu0 0
        %1186 = vmatpush1.bf16.msra.mxu0 0
        %1187 = vmatprep.subr.bf16.mxu0 0
        %1188 = vmatpush1.bf16.msra.mxu0 0
        %1189 = vmatprep.mubr.bf16.mxu0 0
        %1190 = vmatmul.mubr.bf16.gmra.mrb[0].mxu0 %v987
        %v1191 = vpop.f32.mrb[0].mxu0
        %v1192 = vadd.f32 0.0, %v1191
        %v1193 = vpop.f32.mrb[0].mxu0
        %v1194 = vpop.f32.mrb[0].mxu0
        %v1195 = vpop.f32.mrb[0].mxu0
        %1196 = vdwg.mxu0
        %v1197 = vpack.c.bf16 %v1192, %v1192
        %s1198 = scalar_lea.vmem [#allocation2], 4
        %v1199 = vld [vmem:[%s1198] sm:$0xf]
        %v1201 = vsel %vm1031, %v1197, 0
        %v1204 = vsel %vm1031, %v1199, 0
        %1206 = vmatprep.subr.bf16.mxu0 0
        %1207 = vmatpush1.bf16.xpose.msra.mxu0 %v1204
        %1208 = vmatprep.subr.bf16.mxu0 0
        %1209 = vmatpush1.bf16.xpose.msra.mxu0 0
        %1210 = vmatprep.subr.bf16.mxu0 0
        %1211 = vmatpush1.bf16.xpose.msra.mxu0 0
        %1212 = vmatprep.subr.bf16.mxu0 0
        %1213 = vmatpush1.bf16.xpose.msra.mxu0 0
        %1214 = vmatprep.subr.bf16.mxu0 0
        %1215 = vmatpush1.bf16.xpose.msra.mxu0 0
        %1216 = vmatprep.subr.bf16.mxu0 0
        %1217 = vmatpush1.bf16.xpose.msra.mxu0 0
        %1218 = vmatprep.subr.bf16.mxu0 0
        %1219 = vmatpush1.bf16.xpose.msra.mxu0 0
        %1220 = vmatprep.subr.bf16.mxu0 0
        %1221 = vmatpush1.bf16.xpose.msra.mxu0 0
        %1222 = vmatprep.subr.bf16.mxu0 0
        %1223 = vmatpush1.bf16.xpose.msra.mxu0 0
        %1224 = vmatprep.subr.bf16.mxu0 0
        %1225 = vmatpush1.bf16.xpose.msra.mxu0 0
        %1226 = vmatprep.subr.bf16.mxu0 0
        %1227 = vmatpush1.bf16.xpose.msra.mxu0 0
        %1228 = vmatprep.subr.bf16.mxu0 0
        %1229 = vmatpush1.bf16.xpose.msra.mxu0 0
        %1230 = vmatprep.subr.bf16.mxu0 0
        %1231 = vmatpush1.bf16.xpose.msra.mxu0 0
        %1232 = vmatprep.subr.bf16.mxu0 0
        %1233 = vmatpush1.bf16.xpose.msra.mxu0 0
        %1234 = vmatprep.subr.bf16.mxu0 0
        %1235 = vmatpush1.bf16.xpose.msra.mxu0 0
        %1236 = vmatprep.subr.bf16.mxu0 0
        %1237 = vmatpush1.bf16.xpose.msra.mxu0 0
        %1238 = vmatprep.mubr.bf16.mxu0 0
        %1239 = vmatmul.mubr.bf16.gmra.mrb[0].mxu0 %v1201
        %v1240 = vpop.f32.mrb[0].mxu0
        %v1241 = vadd.f32 0.0, %v1240
        %v1242 = vpop.f32.mrb[0].mxu0
        %v1243 = vpop.f32.mrb[0].mxu0
        %v1244 = vpop.f32.mrb[0].mxu0
        %1245 = vdwg.mxu0
        %v1246 = vsel %vm1031, %v1241, -inf
        %1247 = vmax.xlane.f32.xlu0 %v1246
        %v1248 = vpop.xlane.xlu0 %1247
        %v1249 = vsub.f32 %v1241, %v1248
        %v1250 = vmul.f32 %v1249, 1.442695
        %v1251 = vpow.pop %v1250
        %v1252 = vsel %vm1031, %v1251, 0.0
        %1253 = vadd.xlane.f32.xlu0 %v1252
        %v1254 = vpop.xlane.xlu0 %1253
        %v1255 = vrcp.pop %v1254
        %v1256 = vmul.f32 %v1251, %v1255
        %v1257 = vpack.c.bf16 %v1256, %v1256
        %s1258 = scalar_lea.vmem [#allocation3], 4
        %v1259 = vld [vmem:[%s1258] sm:$0xf]
        %v1261 = vsel %vm1031, %v1257, 0
        %v1264 = vsel %vm1094, %v1259, 0
        %1266 = vmatprep.subr.bf16.mxu0 0
        %1267 = vmatpush1.bf16.msra.mxu0 %v1264
        %1268 = vmatprep.subr.bf16.mxu0 0
        %1269 = vmatpush1.bf16.msra.mxu0 0
        %1270 = vmatprep.subr.bf16.mxu0 0
        %1271 = vmatpush1.bf16.msra.mxu0 0
        %1272 = vmatprep.subr.bf16.mxu0 0
        %1273 = vmatpush1.bf16.msra.mxu0 0
        %1274 = vmatprep.subr.bf16.mxu0 0
        %1275 = vmatpush1.bf16.msra.mxu0 0
        %1276 = vmatprep.subr.bf16.mxu0 0
        %1277 = vmatpush1.bf16.msra.mxu0 0
        %1278 = vmatprep.subr.bf16.mxu0 0
        %1279 = vmatpush1.bf16.msra.mxu0 0
        %1280 = vmatprep.subr.bf16.mxu0 0
        %1281 = vmatpush1.bf16.msra.mxu0 0
        %1282 = vmatprep.subr.bf16.mxu0 0
        %1283 = vmatpush1.bf16.msra.mxu0 0
        %1284 = vmatprep.subr.bf16.mxu0 0
        %1285 = vmatpush1.bf16.msra.mxu0 0
        %1286 = vmatprep.subr.bf16.mxu0 0
        %1287 = vmatpush1.bf16.msra.mxu0 0
        %1288 = vmatprep.subr.bf16.mxu0 0
        %1289 = vmatpush1.bf16.msra.mxu0 0
        %1290 = vmatprep.subr.bf16.mxu0 0
        %1291 = vmatpush1.bf16.msra.mxu0 0
        %1292 = vmatprep.subr.bf16.mxu0 0
        %1293 = vmatpush1.bf16.msra.mxu0 0
        %1294 = vmatprep.subr.bf16.mxu0 0
        %1295 = vmatpush1.bf16.msra.mxu0 0
        %1296 = vmatprep.subr.bf16.mxu0 0
        %1297 = vmatpush1.bf16.msra.mxu0 0
        %1298 = vmatprep.mubr.bf16.mxu0 0
        %1299 = vmatmul.mubr.bf16.gmra.mrb[0].mxu0 %v1261
        %v1300 = vpop.f32.mrb[0].mxu0
        %v1301 = vadd.f32 0.0, %v1300
        %v1302 = vpop.f32.mrb[0].mxu0
        %v1303 = vpop.f32.mrb[0].mxu0
        %v1304 = vpop.f32.mrb[0].mxu0
        %1305 = vdwg.mxu0
        %v1306 = vpack.c.bf16 %v1301, %v1301
        %s1307 = scalar_lea.vmem %s4, 4
        %v1308 = vld [vmem:[%s1307] sm:$0xf]
        %v1310 = vsel %vm1031, %v1306, 0
        %v1313 = vsel %vm1094, %v1308, 0
        %1315 = vmatprep.subr.bf16.mxu0 0
        %1316 = vmatpush1.bf16.msra.mxu0 %v1313
        %1317 = vmatprep.subr.bf16.mxu0 0
        %1318 = vmatpush1.bf16.msra.mxu0 0
        %1319 = vmatprep.subr.bf16.mxu0 0
        %1320 = vmatpush1.bf16.msra.mxu0 0
        %1321 = vmatprep.subr.bf16.mxu0 0
        %1322 = vmatpush1.bf16.msra.mxu0 0
        %1323 = vmatprep.subr.bf16.mxu0 0
        %1324 = vmatpush1.bf16.msra.mxu0 0
        %1325 = vmatprep.subr.bf16.mxu0 0
        %1326 = vmatpush1.bf16.msra.mxu0 0
        %1327 = vmatprep.subr.bf16.mxu0 0
        %1328 = vmatpush1.bf16.msra.mxu0 0
        %1329 = vmatprep.subr.bf16.mxu0 0
        %1330 = vmatpush1.bf16.msra.mxu0 0
        %1331 = vmatprep.subr.bf16.mxu0 0
        %1332 = vmatpush1.bf16.msra.mxu0 0
        %1333 = vmatprep.subr.bf16.mxu0 0
        %1334 = vmatpush1.bf16.msra.mxu0 0
        %1335 = vmatprep.subr.bf16.mxu0 0
        %1336 = vmatpush1.bf16.msra.mxu0 0
        %1337 = vmatprep.subr.bf16.mxu0 0
        %1338 = vmatpush1.bf16.msra.mxu0 0
        %1339 = vmatprep.subr.bf16.mxu0 0
        %1340 = vmatpush1.bf16.msra.mxu0 0
        %1341 = vmatprep.subr.bf16.mxu0 0
        %1342 = vmatpush1.bf16.msra.mxu0 0
        %1343 = vmatprep.subr.bf16.mxu0 0
        %1344 = vmatpush1.bf16.msra.mxu0 0
        %1345 = vmatprep.subr.bf16.mxu0 0
        %1346 = vmatpush1.bf16.msra.mxu0 0
        %1347 = vmatprep.mubr.bf16.mxu0 0
        %1348 = vmatmul.mubr.bf16.gmra.mrb[0].mxu0 %v1310
        %v1349 = vpop.f32.mrb[0].mxu0
        %v1350 = vadd.f32 0.0, %v1349
        %v1351 = vpop.f32.mrb[0].mxu0
        %v1352 = vpop.f32.mrb[0].mxu0
        %v1353 = vpop.f32.mrb[0].mxu0
        %1354 = vdwg.mxu0
        %v1356 = vsel %vm1031, %v1138, 0
        %v1359 = vsel %vm1094, %v1139, 0
        %1361 = vmatprep.subr.bf16.mxu0 0
        %1362 = vmatpush1.bf16.msra.mxu0 %v1359
        %1363 = vmatprep.subr.bf16.mxu0 0
        %1364 = vmatpush1.bf16.msra.mxu0 0
        %1365 = vmatprep.subr.bf16.mxu0 0
        %1366 = vmatpush1.bf16.msra.mxu0 0
        %1367 = vmatprep.subr.bf16.mxu0 0
        %1368 = vmatpush1.bf16.msra.mxu0 0
        %1369 = vmatprep.subr.bf16.mxu0 0
        %1370 = vmatpush1.bf16.msra.mxu0 0
        %1371 = vmatprep.subr.bf16.mxu0 0
        %1372 = vmatpush1.bf16.msra.mxu0 0
        %1373 = vmatprep.subr.bf16.mxu0 0
        %1374 = vmatpush1.bf16.msra.mxu0 0
        %1375 = vmatprep.subr.bf16.mxu0 0
        %1376 = vmatpush1.bf16.msra.mxu0 0
        %1377 = vmatprep.subr.bf16.mxu0 0
        %1378 = vmatpush1.bf16.msra.mxu0 0
        %1379 = vmatprep.subr.bf16.mxu0 0
        %1380 = vmatpush1.bf16.msra.mxu0 0
        %1381 = vmatprep.subr.bf16.mxu0 0
        %1382 = vmatpush1.bf16.msra.mxu0 0
        %1383 = vmatprep.subr.bf16.mxu0 0
        %1384 = vmatpush1.bf16.msra.mxu0 0
        %1385 = vmatprep.subr.bf16.mxu0 0
        %1386 = vmatpush1.bf16.msra.mxu0 0
        %1387 = vmatprep.subr.bf16.mxu0 0
        %1388 = vmatpush1.bf16.msra.mxu0 0
        %1389 = vmatprep.subr.bf16.mxu0 0
        %1390 = vmatpush1.bf16.msra.mxu0 0
        %1391 = vmatprep.subr.bf16.mxu0 0
        %1392 = vmatpush1.bf16.msra.mxu0 0
        %1393 = vmatprep.mubr.bf16.mxu0 0
        %1394 = vmatmul.mubr.bf16.gmra.mrb[0].mxu0 %v1356
        %v1395 = vpop.f32.mrb[0].mxu0
        %v1396 = vadd.f32 %v1350, %v1395
        %v1397 = vpop.f32.mrb[0].mxu0
        %v1398 = vpop.f32.mrb[0].mxu0
        %v1399 = vpop.f32.mrb[0].mxu0
        %1400 = vdwg.mxu0
        %s1401 = scalar_lea.vmem %s1, 32
        %v1402 = vld [vmem:[%s1401] sm:$0xf]
        %v1403 = vld [vmem:[%s1401 + $0x4] sm:$0xf]
        %v1404 = vld [vmem:[%s1401 + $0x8] sm:$0xf]
        %v1405 = vld [vmem:[%s1401 + $0xc] sm:$0xf]
        %v1410 = vunpack.c.l.b16 %v1402
        %v1411 = vunpack.c.l.b16 %v1403
        %v1412 = vunpack.c.l.b16 %v1404
        %v1413 = vunpack.c.l.b16 %v1405
        %v1414 = vpack.c.b16 %v1411, %v1410
        %v1415 = vpack.c.b16 %v1413, %v1412
        %1418 = vmatprep.subr.bf16.mxu0 0
        %1419 = vmatpush1.bf16.msra.mxu0 %v1414
        %1420 = vmatprep.subr.bf16.mxu0 0
        %1421 = vmatpush1.bf16.msra.mxu0 %v1415
        %1422 = vmatprep.subr.bf16.mxu0 0
        %1423 = vmatpush1.bf16.msra.mxu0 0
        %1424 = vmatprep.subr.bf16.mxu0 0
        %1425 = vmatpush1.bf16.msra.mxu0 0
        %1426 = vmatprep.subr.bf16.mxu0 0
        %1427 = vmatpush1.bf16.msra.mxu0 0
        %1428 = vmatprep.subr.bf16.mxu0 0
        %1429 = vmatpush1.bf16.msra.mxu0 0
        %1430 = vmatprep.subr.bf16.mxu0 0
        %1431 = vmatpush1.bf16.msra.mxu0 0
        %1432 = vmatprep.subr.bf16.mxu0 0
        %1433 = vmatpush1.bf16.msra.mxu0 0
        %1434 = vmatprep.subr.bf16.mxu0 0
        %1435 = vmatpush1.bf16.msra.mxu0 0
        %1436 = vmatprep.subr.bf16.mxu0 0
        %1437 = vmatpush1.bf16.msra.mxu0 0
        %1438 = vmatprep.subr.bf16.mxu0 0
        %1439 = vmatpush1.bf16.msra.mxu0 0
        %1440 = vmatprep.subr.bf16.mxu0 0
        %1441 = vmatpush1.bf16.msra.mxu0 0
        %1442 = vmatprep.subr.bf16.mxu0 0
        %1443 = vmatpush1.bf16.msra.mxu0 0
        %1444 = vmatprep.subr.bf16.mxu0 0
        %1445 = vmatpush1.bf16.msra.mxu0 0
        %1446 = vmatprep.subr.bf16.mxu0 0
        %1447 = vmatpush1.bf16.msra.mxu0 0
        %1448 = vmatprep.subr.bf16.mxu0 0
        %1449 = vmatpush1.bf16.msra.mxu0 0
        %1450 = vmatprep.mubr.bf16.mxu0 0
        %1451 = vmatmul.mubr.bf16.gmra.mrb[0].mxu0 %v987
        %v1452 = vpop.f32.mrb[0].mxu0
        %v1453 = vadd.f32 0.0, %v1452
        %v1454 = vpop.f32.mrb[0].mxu0
        %v1455 = vpop.f32.mrb[0].mxu0
        %v1456 = vpop.f32.mrb[0].mxu0
        %1457 = vdwg.mxu0
        %v1458 = vpack.c.bf16 %v1453, %v1453
        %s1459 = scalar_lea.vmem [#allocation2], 8
        %v1460 = vld [vmem:[%s1459] sm:$0xf]
        %v1462 = vsel %vm1031, %v1458, 0
        %v1465 = vsel %vm1031, %v1460, 0
        %1467 = vmatprep.subr.bf16.mxu0 0
        %1468 = vmatpush1.bf16.xpose.msra.mxu0 %v1465
        %1469 = vmatprep.subr.bf16.mxu0 0
        %1470 = vmatpush1.bf16.xpose.msra.mxu0 0
        %1471 = vmatprep.subr.bf16.mxu0 0
        %1472 = vmatpush1.bf16.xpose.msra.mxu0 0
        %1473 = vmatprep.subr.bf16.mxu0 0
        %1474 = vmatpush1.bf16.xpose.msra.mxu0 0
        %1475 = vmatprep.subr.bf16.mxu0 0
        %1476 = vmatpush1.bf16.xpose.msra.mxu0 0
        %1477 = vmatprep.subr.bf16.mxu0 0
        %1478 = vmatpush1.bf16.xpose.msra.mxu0 0
        %1479 = vmatprep.subr.bf16.mxu0 0
        %1480 = vmatpush1.bf16.xpose.msra.mxu0 0
        %1481 = vmatprep.subr.bf16.mxu0 0
        %1482 = vmatpush1.bf16.xpose.msra.mxu0 0
        %1483 = vmatprep.subr.bf16.mxu0 0
        %1484 = vmatpush1.bf16.xpose.msra.mxu0 0
        %1485 = vmatprep.subr.bf16.mxu0 0
        %1486 = vmatpush1.bf16.xpose.msra.mxu0 0
        %1487 = vmatprep.subr.bf16.mxu0 0
        %1488 = vmatpush1.bf16.xpose.msra.mxu0 0
        %1489 = vmatprep.subr.bf16.mxu0 0
        %1490 = vmatpush1.bf16.xpose.msra.mxu0 0
        %1491 = vmatprep.subr.bf16.mxu0 0
        %1492 = vmatpush1.bf16.xpose.msra.mxu0 0
        %1493 = vmatprep.subr.bf16.mxu0 0
        %1494 = vmatpush1.bf16.xpose.msra.mxu0 0
        %1495 = vmatprep.subr.bf16.mxu0 0
        %1496 = vmatpush1.bf16.xpose.msra.mxu0 0
        %1497 = vmatprep.subr.bf16.mxu0 0
        %1498 = vmatpush1.bf16.xpose.msra.mxu0 0
        %1499 = vmatprep.mubr.bf16.mxu0 0
        %1500 = vmatmul.mubr.bf16.gmra.mrb[0].mxu0 %v1462
        %v1501 = vpop.f32.mrb[0].mxu0
        %v1502 = vadd.f32 0.0, %v1501
        %v1503 = vpop.f32.mrb[0].mxu0
        %v1504 = vpop.f32.mrb[0].mxu0
        %v1505 = vpop.f32.mrb[0].mxu0
        %1506 = vdwg.mxu0
        %v1507 = vsel %vm1031, %v1502, -inf
        %1508 = vmax.xlane.f32.xlu0 %v1507
        %v1509 = vpop.xlane.xlu0 %1508
        %v1510 = vsub.f32 %v1502, %v1509
        %v1511 = vmul.f32 %v1510, 1.442695
        %v1512 = vpow.pop %v1511
        %v1513 = vsel %vm1031, %v1512, 0.0
        %1514 = vadd.xlane.f32.xlu0 %v1513
        %v1515 = vpop.xlane.xlu0 %1514
        %v1516 = vrcp.pop %v1515
        %v1517 = vmul.f32 %v1512, %v1516
        %v1518 = vpack.c.bf16 %v1517, %v1517
        %s1519 = scalar_lea.vmem [#allocation3], 8
        %v1520 = vld [vmem:[%s1519] sm:$0xf]
        %v1522 = vsel %vm1031, %v1518, 0
        %v1525 = vsel %vm1094, %v1520, 0
        %1527 = vmatprep.subr.bf16.mxu0 0
        %1528 = vmatpush1.bf16.msra.mxu0 %v1525
        %1529 = vmatprep.subr.bf16.mxu0 0
        %1530 = vmatpush1.bf16.msra.mxu0 0
        %1531 = vmatprep.subr.bf16.mxu0 0
        %1532 = vmatpush1.bf16.msra.mxu0 0
        %1533 = vmatprep.subr.bf16.mxu0 0
        %1534 = vmatpush1.bf16.msra.mxu0 0
        %1535 = vmatprep.subr.bf16.mxu0 0
        %1536 = vmatpush1.bf16.msra.mxu0 0
        %1537 = vmatprep.subr.bf16.mxu0 0
        %1538 = vmatpush1.bf16.msra.mxu0 0
        %1539 = vmatprep.subr.bf16.mxu0 0
        %1540 = vmatpush1.bf16.msra.mxu0 0
        %1541 = vmatprep.subr.bf16.mxu0 0
        %1542 = vmatpush1.bf16.msra.mxu0 0
        %1543 = vmatprep.subr.bf16.mxu0 0
        %1544 = vmatpush1.bf16.msra.mxu0 0
        %1545 = vmatprep.subr.bf16.mxu0 0
        %1546 = vmatpush1.bf16.msra.mxu0 0
        %1547 = vmatprep.subr.bf16.mxu0 0
        %1548 = vmatpush1.bf16.msra.mxu0 0
        %1549 = vmatprep.subr.bf16.mxu0 0
        %1550 = vmatpush1.bf16.msra.mxu0 0
        %1551 = vmatprep.subr.bf16.mxu0 0
        %1552 = vmatpush1.bf16.msra.mxu0 0
        %1553 = vmatprep.subr.bf16.mxu0 0
        %1554 = vmatpush1.bf16.msra.mxu0 0
        %1555 = vmatprep.subr.bf16.mxu0 0
        %1556 = vmatpush1.bf16.msra.mxu0 0
        %1557 = vmatprep.subr.bf16.mxu0 0
        %1558 = vmatpush1.bf16.msra.mxu0 0
        %1559 = vmatprep.mubr.bf16.mxu0 0
        %1560 = vmatmul.mubr.bf16.gmra.mrb[0].mxu0 %v1522
        %v1561 = vpop.f32.mrb[0].mxu0
        %v1562 = vadd.f32 0.0, %v1561
        %v1563 = vpop.f32.mrb[0].mxu0
        %v1564 = vpop.f32.mrb[0].mxu0
        %v1565 = vpop.f32.mrb[0].mxu0
        %1566 = vdwg.mxu0
        %v1567 = vpack.c.bf16 %v1562, %v1562
        %s1568 = scalar_lea.vmem %s4, 8
        %v1569 = vld [vmem:[%s1568] sm:$0xf]
        %v1571 = vsel %vm1031, %v1567, 0
        %v1574 = vsel %vm1094, %v1569, 0
        %1576 = vmatprep.subr.bf16.mxu0 0
        %1577 = vmatpush1.bf16.msra.mxu0 %v1574
        %1578 = vmatprep.subr.bf16.mxu0 0
        %1579 = vmatpush1.bf16.msra.mxu0 0
        %1580 = vmatprep.subr.bf16.mxu0 0
        %1581 = vmatpush1.bf16.msra.mxu0 0
        %1582 = vmatprep.subr.bf16.mxu0 0
        %1583 = vmatpush1.bf16.msra.mxu0 0
        %1584 = vmatprep.subr.bf16.mxu0 0
        %1585 = vmatpush1.bf16.msra.mxu0 0
        %1586 = vmatprep.subr.bf16.mxu0 0
        %1587 = vmatpush1.bf16.msra.mxu0 0
        %1588 = vmatprep.subr.bf16.mxu0 0
        %1589 = vmatpush1.bf16.msra.mxu0 0
        %1590 = vmatprep.subr.bf16.mxu0 0
        %1591 = vmatpush1.bf16.msra.mxu0 0
        %1592 = vmatprep.subr.bf16.mxu0 0
        %1593 = vmatpush1.bf16.msra.mxu0 0
        %1594 = vmatprep.subr.bf16.mxu0 0
        %1595 = vmatpush1.bf16.msra.mxu0 0
        %1596 = vmatprep.subr.bf16.mxu0 0
        %1597 = vmatpush1.bf16.msra.mxu0 0
        %1598 = vmatprep.subr.bf16.mxu0 0
        %1599 = vmatpush1.bf16.msra.mxu0 0
        %1600 = vmatprep.subr.bf16.mxu0 0
        %1601 = vmatpush1.bf16.msra.mxu0 0
        %1602 = vmatprep.subr.bf16.mxu0 0
        %1603 = vmatpush1.bf16.msra.mxu0 0
        %1604 = vmatprep.subr.bf16.mxu0 0
        %1605 = vmatpush1.bf16.msra.mxu0 0
        %1606 = vmatprep.subr.bf16.mxu0 0
        %1607 = vmatpush1.bf16.msra.mxu0 0
        %1608 = vmatprep.mubr.bf16.mxu0 0
        %1609 = vmatmul.mubr.bf16.gmra.mrb[0].mxu0 %v1571
        %v1610 = vpop.f32.mrb[0].mxu0
        %v1611 = vadd.f32 0.0, %v1610
        %v1612 = vpop.f32.mrb[0].mxu0
        %v1613 = vpop.f32.mrb[0].mxu0
        %v1614 = vpop.f32.mrb[0].mxu0
        %1615 = vdwg.mxu0
        %v1616 = vadd.f32 %v1396, %v1611
        %s1617 = scalar_lea.vmem %s1, 48
        %v1618 = vld [vmem:[%s1617] sm:$0xf]
        %v1619 = vld [vmem:[%s1617 + $0x4] sm:$0xf]
        %v1620 = vld [vmem:[%s1617 + $0x8] sm:$0xf]
        %v1621 = vld [vmem:[%s1617 + $0xc] sm:$0xf]
        %v1626 = vunpack.c.l.b16 %v1618
        %v1627 = vunpack.c.l.b16 %v1619
        %v1628 = vunpack.c.l.b16 %v1620
        %v1629 = vunpack.c.l.b16 %v1621
        %v1630 = vpack.c.b16 %v1627, %v1626
        %v1631 = vpack.c.b16 %v1629, %v1628
        %1634 = vmatprep.subr.bf16.mxu0 0
        %1635 = vmatpush1.bf16.msra.mxu0 %v1630
        %1636 = vmatprep.subr.bf16.mxu0 0
        %1637 = vmatpush1.bf16.msra.mxu0 %v1631
        %1638 = vmatprep.subr.bf16.mxu0 0
        %1639 = vmatpush1.bf16.msra.mxu0 0
        %1640 = vmatprep.subr.bf16.mxu0 0
        %1641 = vmatpush1.bf16.msra.mxu0 0
        %1642 = vmatprep.subr.bf16.mxu0 0
        %1643 = vmatpush1.bf16.msra.mxu0 0
        %1644 = vmatprep.subr.bf16.mxu0 0
        %1645 = vmatpush1.bf16.msra.mxu0 0
        %1646 = vmatprep.subr.bf16.mxu0 0
        %1647 = vmatpush1.bf16.msra.mxu0 0
        %1648 = vmatprep.subr.bf16.mxu0 0
        %1649 = vmatpush1.bf16.msra.mxu0 0
        %1650 = vmatprep.subr.bf16.mxu0 0
        %1651 = vmatpush1.bf16.msra.mxu0 0
        %1652 = vmatprep.subr.bf16.mxu0 0
        %1653 = vmatpush1.bf16.msra.mxu0 0
        %1654 = vmatprep.subr.bf16.mxu0 0
        %1655 = vmatpush1.bf16.msra.mxu0 0
        %1656 = vmatprep.subr.bf16.mxu0 0
        %1657 = vmatpush1.bf16.msra.mxu0 0
        %1658 = vmatprep.subr.bf16.mxu0 0
        %1659 = vmatpush1.bf16.msra.mxu0 0
        %1660 = vmatprep.subr.bf16.mxu0 0
        %1661 = vmatpush1.bf16.msra.mxu0 0
        %1662 = vmatprep.subr.bf16.mxu0 0
        %1663 = vmatpush1.bf16.msra.mxu0 0
        %1664 = vmatprep.subr.bf16.mxu0 0
        %1665 = vmatpush1.bf16.msra.mxu0 0
        %1666 = vmatprep.mubr.bf16.mxu0 0
        %1667 = vmatmul.mubr.bf16.gmra.mrb[0].mxu0 %v987
        %v1668 = vpop.f32.mrb[0].mxu0
        %v1669 = vadd.f32 0.0, %v1668
        %v1670 = vpop.f32.mrb[0].mxu0
        %v1671 = vpop.f32.mrb[0].mxu0
        %v1672 = vpop.f32.mrb[0].mxu0
        %1673 = vdwg.mxu0
        %v1674 = vpack.c.bf16 %v1669, %v1669
        %s1675 = scalar_lea.vmem [#allocation2], 12
        %v1676 = vld [vmem:[%s1675] sm:$0xf]
        %v1678 = vsel %vm1031, %v1674, 0
        %v1681 = vsel %vm1031, %v1676, 0
        %1683 = vmatprep.subr.bf16.mxu0 0
        %1684 = vmatpush1.bf16.xpose.msra.mxu0 %v1681
        %1685 = vmatprep.subr.bf16.mxu0 0
        %1686 = vmatpush1.bf16.xpose.msra.mxu0 0
        %1687 = vmatprep.subr.bf16.mxu0 0
        %1688 = vmatpush1.bf16.xpose.msra.mxu0 0
        %1689 = vmatprep.subr.bf16.mxu0 0
        %1690 = vmatpush1.bf16.xpose.msra.mxu0 0
        %1691 = vmatprep.subr.bf16.mxu0 0
        %1692 = vmatpush1.bf16.xpose.msra.mxu0 0
        %1693 = vmatprep.subr.bf16.mxu0 0
        %1694 = vmatpush1.bf16.xpose.msra.mxu0 0
        %1695 = vmatprep.subr.bf16.mxu0 0
        %1696 = vmatpush1.bf16.xpose.msra.mxu0 0
        %1697 = vmatprep.subr.bf16.mxu0 0
        %1698 = vmatpush1.bf16.xpose.msra.mxu0 0
        %1699 = vmatprep.subr.bf16.mxu0 0
        %1700 = vmatpush1.bf16.xpose.msra.mxu0 0
        %1701 = vmatprep.subr.bf16.mxu0 0
        %1702 = vmatpush1.bf16.xpose.msra.mxu0 0
        %1703 = vmatprep.subr.bf16.mxu0 0
        %1704 = vmatpush1.bf16.xpose.msra.mxu0 0
        %1705 = vmatprep.subr.bf16.mxu0 0
        %1706 = vmatpush1.bf16.xpose.msra.mxu0 0
        %1707 = vmatprep.subr.bf16.mxu0 0
        %1708 = vmatpush1.bf16.xpose.msra.mxu0 0
        %1709 = vmatprep.subr.bf16.mxu0 0
        %1710 = vmatpush1.bf16.xpose.msra.mxu0 0
        %1711 = vmatprep.subr.bf16.mxu0 0
        %1712 = vmatpush1.bf16.xpose.msra.mxu0 0
        %1713 = vmatprep.subr.bf16.mxu0 0
        %1714 = vmatpush1.bf16.xpose.msra.mxu0 0
        %1715 = vmatprep.mubr.bf16.mxu0 0
        %1716 = vmatmul.mubr.bf16.gmra.mrb[0].mxu0 %v1678
        %v1717 = vpop.f32.mrb[0].mxu0
        %v1718 = vadd.f32 0.0, %v1717
        %v1719 = vpop.f32.mrb[0].mxu0
        %v1720 = vpop.f32.mrb[0].mxu0
        %v1721 = vpop.f32.mrb[0].mxu0
        %1722 = vdwg.mxu0
        %v1723 = vsel %vm1031, %v1718, -inf
        %1724 = vmax.xlane.f32.xlu0 %v1723
        %v1725 = vpop.xlane.xlu0 %1724
        %v1726 = vsub.f32 %v1718, %v1725
        %v1727 = vmul.f32 %v1726, 1.442695
        %v1728 = vpow.pop %v1727
        %v1729 = vsel %vm1031, %v1728, 0.0
        %1730 = vadd.xlane.f32.xlu0 %v1729
        %v1731 = vpop.xlane.xlu0 %1730
        %v1732 = vrcp.pop %v1731
        %v1733 = vmul.f32 %v1728, %v1732
        %v1734 = vpack.c.bf16 %v1733, %v1733
        %s1735 = scalar_lea.vmem [#allocation3], 12
        %v1736 = vld [vmem:[%s1735] sm:$0xf]
        %v1738 = vsel %vm1031, %v1734, 0
        %v1741 = vsel %vm1094, %v1736, 0
        %1743 = vmatprep.subr.bf16.mxu0 0
        %1744 = vmatpush1.bf16.msra.mxu0 %v1741
        %1745 = vmatprep.subr.bf16.mxu0 0
        %1746 = vmatpush1.bf16.msra.mxu0 0
        %1747 = vmatprep.subr.bf16.mxu0 0
        %1748 = vmatpush1.bf16.msra.mxu0 0
        %1749 = vmatprep.subr.bf16.mxu0 0
        %1750 = vmatpush1.bf16.msra.mxu0 0
        %1751 = vmatprep.subr.bf16.mxu0 0
        %1752 = vmatpush1.bf16.msra.mxu0 0
        %1753 = vmatprep.subr.bf16.mxu0 0
        %1754 = vmatpush1.bf16.msra.mxu0 0
        %1755 = vmatprep.subr.bf16.mxu0 0
        %1756 = vmatpush1.bf16.msra.mxu0 0
        %1757 = vmatprep.subr.bf16.mxu0 0
        %1758 = vmatpush1.bf16.msra.mxu0 0
        %1759 = vmatprep.subr.bf16.mxu0 0
        %1760 = vmatpush1.bf16.msra.mxu0 0
        %1761 = vmatprep.subr.bf16.mxu0 0
        %1762 = vmatpush1.bf16.msra.mxu0 0
        %1763 = vmatprep.subr.bf16.mxu0 0
        %1764 = vmatpush1.bf16.msra.mxu0 0
        %1765 = vmatprep.subr.bf16.mxu0 0
        %1766 = vmatpush1.bf16.msra.mxu0 0
        %1767 = vmatprep.subr.bf16.mxu0 0
        %1768 = vmatpush1.bf16.msra.mxu0 0
        %1769 = vmatprep.subr.bf16.mxu0 0
        %1770 = vmatpush1.bf16.msra.mxu0 0
        %1771 = vmatprep.subr.bf16.mxu0 0
        %1772 = vmatpush1.bf16.msra.mxu0 0
        %1773 = vmatprep.subr.bf16.mxu0 0
        %1774 = vmatpush1.bf16.msra.mxu0 0
        %1775 = vmatprep.mubr.bf16.mxu0 0
        %1776 = vmatmul.mubr.bf16.gmra.mrb[0].mxu0 %v1738
        %v1777 = vpop.f32.mrb[0].mxu0
        %v1778 = vadd.f32 0.0, %v1777
        %v1779 = vpop.f32.mrb[0].mxu0
        %v1780 = vpop.f32.mrb[0].mxu0
        %v1781 = vpop.f32.mrb[0].mxu0
        %1782 = vdwg.mxu0
        %v1783 = vpack.c.bf16 %v1778, %v1778
        %s1784 = scalar_lea.vmem %s4, 12
        %v1785 = vld [vmem:[%s1784] sm:$0xf]
        %v1787 = vsel %vm1031, %v1783, 0
        %v1790 = vsel %vm1094, %v1785, 0
        %1792 = vmatprep.subr.bf16.mxu0 0
        %1793 = vmatpush1.bf16.msra.mxu0 %v1790
        %1794 = vmatprep.subr.bf16.mxu0 0
        %1795 = vmatpush1.bf16.msra.mxu0 0
        %1796 = vmatprep.subr.bf16.mxu0 0
        %1797 = vmatpush1.bf16.msra.mxu0 0
        %1798 = vmatprep.subr.bf16.mxu0 0
        %1799 = vmatpush1.bf16.msra.mxu0 0
        %1800 = vmatprep.subr.bf16.mxu0 0
        %1801 = vmatpush1.bf16.msra.mxu0 0
        %1802 = vmatprep.subr.bf16.mxu0 0
        %1803 = vmatpush1.bf16.msra.mxu0 0
        %1804 = vmatprep.subr.bf16.mxu0 0
        %1805 = vmatpush1.bf16.msra.mxu0 0
        %1806 = vmatprep.subr.bf16.mxu0 0
        %1807 = vmatpush1.bf16.msra.mxu0 0
        %1808 = vmatprep.subr.bf16.mxu0 0
        %1809 = vmatpush1.bf16.msra.mxu0 0
        %1810 = vmatprep.subr.bf16.mxu0 0
        %1811 = vmatpush1.bf16.msra.mxu0 0
        %1812 = vmatprep.subr.bf16.mxu0 0
        %1813 = vmatpush1.bf16.msra.mxu0 0
        %1814 = vmatprep.subr.bf16.mxu0 0
        %1815 = vmatpush1.bf16.msra.mxu0 0
        %1816 = vmatprep.subr.bf16.mxu0 0
        %1817 = vmatpush1.bf16.msra.mxu0 0
        %1818 = vmatprep.subr.bf16.mxu0 0
        %1819 = vmatpush1.bf16.msra.mxu0 0
        %1820 = vmatprep.subr.bf16.mxu0 0
        %1821 = vmatpush1.bf16.msra.mxu0 0
        %1822 = vmatprep.subr.bf16.mxu0 0
        %1823 = vmatpush1.bf16.msra.mxu0 0
        %1824 = vmatprep.mubr.bf16.mxu0 0
        %1825 = vmatmul.mubr.bf16.gmra.mrb[0].mxu0 %v1787
        %v1826 = vpop.f32.mrb[0].mxu0
        %v1827 = vadd.f32 0.0, %v1826
        %v1828 = vpop.f32.mrb[0].mxu0
        %v1829 = vpop.f32.mrb[0].mxu0
        %v1830 = vpop.f32.mrb[0].mxu0
        %1831 = vdwg.mxu0
        %v1832 = vadd.f32 %v1616, %v1827
        %v1833 = vld [vmem:[%s5] sm:$0x1]
        %v1835 = vlaneseq
        %v1836 = vshrl.u32 %v1835, 7
        %v1837 = vsub.s32 0, %v1836
        %v1838 = vrot.slane %v1833, %v1837
        %v1840 = vadd.f32 %v1832, %v1838
        %v1841 = vadd.f32 %v967, %v1840
        %v1842 = vld [vmem:[%s6] sm:$0x1]
        %v1843 = vld [vmem:[%s7] sm:$0x1]
        %v1844 = vsel %vm985, %v1841, 0.0
        %1845 = vadd.xlane.f32.xlu0 %v1844
        %v1846 = vpop.xlane.xlu0 %1845
        %v1847 = vrcp.pop 32.0
        %v1848 = vmul.f32 %v1846, %v1847
        %v1849 = vmul.f32 %v1841, %v1841
        %v1850 = vsel %vm985, %v1849, 0.0
        %1851 = vadd.xlane.f32.xlu0 %v1850
        %v1852 = vpop.xlane.xlu0 %1851
        %v1853 = vmul.f32 %v1852, %v1847
        %v1854 = vmul.f32 %v1848, %v1848
        %v1855 = vsub.f32 %v1853, %v1854
        %v1856 = vadd.f32 %v1855, 1e-06
        %v1857 = vrsqrt.pop %v1856
        %v1858 = vsub.f32 %v1841, %v1848
        %v1859 = vmul.f32 %v1858, %v1857
        %v1861 = vlaneseq
        %v1862 = vshrl.u32 %v1861, 7
        %v1863 = vsub.s32 0, %v1862
        %v1864 = vrot.slane %v1842, %v1863
        %v1866 = vmul.f32 %v1864, %v1859
        %v1868 = vlaneseq
        %v1869 = vshrl.u32 %v1868, 7
        %v1870 = vsub.s32 0, %v1869
        %v1871 = vrot.slane %v1843, %v1870
        %v1873 = vadd.f32 %v1866, %v1871
        %v1874 = vpack.c.bf16 %v1873, %v1873
        %v1875 = vld [vmem:[%s8] sm:$0xf]
        %v1876 = vld [vmem:[%s8 + $0x4] sm:$0xf]
        %v1877 = vld [vmem:[%s8 + $0x8] sm:$0xf]
        %v1878 = vld [vmem:[%s8 + $0xc] sm:$0xf]
        %v1879 = vld [vmem:[%s9] sm:$0x1]
        %v1881 = vlaneseq
        %v1882 = vshrl.u32 %v1881, 7
        %v1883 = vsub.s32 0, %v1882
        %v1884 = vrot.slane %v1879, %v1883
        %v1890 = vunpack.c.l.b16 %v1875
        %v1891 = vunpack.c.l.b16 %v1876
        %v1892 = vunpack.c.l.b16 %v1877
        %v1893 = vunpack.c.l.b16 %v1878
        %v1894 = vpack.c.b16 %v1891, %v1890
        %v1895 = vpack.c.b16 %v1893, %v1892
        %v1899 = vsel %vm985, %v1874, 0
        %1901 = vmatprep.subr.bf16.mxu0 0
        %1902 = vmatpush1.bf16.msra.mxu0 %v1894
        %1903 = vmatprep.subr.bf16.mxu0 0
        %1904 = vmatpush1.bf16.msra.mxu0 %v1895
        %1905 = vmatprep.subr.bf16.mxu0 0
        %1906 = vmatpush1.bf16.msra.mxu0 0
        %1907 = vmatprep.subr.bf16.mxu0 0
        %1908 = vmatpush1.bf16.msra.mxu0 0
        %1909 = vmatprep.subr.bf16.mxu0 0
        %1910 = vmatpush1.bf16.msra.mxu0 0
        %1911 = vmatprep.subr.bf16.mxu0 0
        %1912 = vmatpush1.bf16.msra.mxu0 0
        %1913 = vmatprep.subr.bf16.mxu0 0
        %1914 = vmatpush1.bf16.msra.mxu0 0
        %1915 = vmatprep.subr.bf16.mxu0 0
        %1916 = vmatpush1.bf16.msra.mxu0 0
        %1917 = vmatprep.subr.bf16.mxu0 0
        %1918 = vmatpush1.bf16.msra.mxu0 0
        %1919 = vmatprep.subr.bf16.mxu0 0
        %1920 = vmatpush1.bf16.msra.mxu0 0
        %1921 = vmatprep.subr.bf16.mxu0 0
        %1922 = vmatpush1.bf16.msra.mxu0 0
        %1923 = vmatprep.subr.bf16.mxu0 0
        %1924 = vmatpush1.bf16.msra.mxu0 0
        %1925 = vmatprep.subr.bf16.mxu0 0
        %1926 = vmatpush1.bf16.msra.mxu0 0
        %1927 = vmatprep.subr.bf16.mxu0 0
        %1928 = vmatpush1.bf16.msra.mxu0 0
        %1929 = vmatprep.subr.bf16.mxu0 0
        %1930 = vmatpush1.bf16.msra.mxu0 0
        %1931 = vmatprep.subr.bf16.mxu0 0
        %1932 = vmatpush1.bf16.msra.mxu0 0
        %1933 = vmatprep.mubr.bf16.mxu0 0
        %1934 = vmatmul.mubr.bf16.gmra.mrb[0].mxu0 %v1899
        %v1935 = vpop.f32.mrb[0].mxu0
        %v1936 = vadd.f32 %v1884, %v1935
        %v1937 = vpop.f32.mrb[0].mxu0
        %v1938 = vpop.f32.mrb[0].mxu0
        %v1939 = vpop.f32.mrb[0].mxu0
        %1940 = vdwg.mxu0
        %v1941 = vmax.f32 %v1936, 0.0
        %v1942 = vpack.c.bf16 %v1941, %v1941
        %v1943 = vld [vmem:[%s10] sm:$0xf]
        %v1944 = vld [vmem:[%s10 + $0x4] sm:$0xf]
        %v1945 = vld [vmem:[%s10 + $0x8] sm:$0xf]
        %v1946 = vld [vmem:[%s10 + $0xc] sm:$0xf]
        %v1947 = vld [vmem:[%s10 + $0x10] sm:$0xf]
        %v1948 = vld [vmem:[%s10 + $0x14] sm:$0xf]
        %v1949 = vld [vmem:[%s10 + $0x18] sm:$0xf]
        %v1950 = vld [vmem:[%s10 + $0x1c] sm:$0xf]
        %v1951 = vld [vmem:[%s11] sm:$0x1]
        %v1953 = vlaneseq
        %v1954 = vshrl.u32 %v1953, 7
        %v1955 = vsub.s32 0, %v1954
        %v1956 = vrot.slane %v1951, %v1955
        %v1966 = vunpack.c.l.b16 %v1943
        %v1967 = vunpack.c.l.b16 %v1944
        %v1968 = vunpack.c.l.b16 %v1945
        %v1969 = vunpack.c.l.b16 %v1946
        %v1970 = vunpack.c.l.b16 %v1947
        %v1971 = vunpack.c.l.b16 %v1948
        %v1972 = vunpack.c.l.b16 %v1949
        %v1973 = vunpack.c.l.b16 %v1950
        %v1974 = vpack.c.b16 %v1967, %v1966
        %v1975 = vpack.c.b16 %v1969, %v1968
        %v1976 = vpack.c.b16 %v1971, %v1970
        %v1977 = vpack.c.b16 %v1973, %v1972
        %vm1982 = vcmask 523264
        %v1984 = vsel %vm1982, %v1942, 0
        %1986 = vmatprep.subr.bf16.mxu0 0
        %1987 = vmatpush1.bf16.msra.mxu0 %v1974
        %1988 = vmatprep.subr.bf16.mxu0 0
        %1989 = vmatpush1.bf16.msra.mxu0 %v1975
        %1990 = vmatprep.subr.bf16.mxu0 0
        %1991 = vmatpush1.bf16.msra.mxu0 %v1976
        %1992 = vmatprep.subr.bf16.mxu0 0
        %1993 = vmatpush1.bf16.msra.mxu0 %v1977
        %1994 = vmatprep.subr.bf16.mxu0 0
        %1995 = vmatpush1.bf16.msra.mxu0 0
        %1996 = vmatprep.subr.bf16.mxu0 0
        %1997 = vmatpush1.bf16.msra.mxu0 0
        %1998 = vmatprep.subr.bf16.mxu0 0
        %1999 = vmatpush1.bf16.msra.mxu0 0
        %2000 = vmatprep.subr.bf16.mxu0 0
        %2001 = vmatpush1.bf16.msra.mxu0 0
        %2002 = vmatprep.subr.bf16.mxu0 0
        %2003 = vmatpush1.bf16.msra.mxu0 0
        %2004 = vmatprep.subr.bf16.mxu0 0
        %2005 = vmatpush1.bf16.msra.mxu0 0
        %2006 = vmatprep.subr.bf16.mxu0 0
        %2007 = vmatpush1.bf16.msra.mxu0 0
        %2008 = vmatprep.subr.bf16.mxu0 0
        %2009 = vmatpush1.bf16.msra.mxu0 0
        %2010 = vmatprep.subr.bf16.mxu0 0
        %2011 = vmatpush1.bf16.msra.mxu0 0
        %2012 = vmatprep.subr.bf16.mxu0 0
        %2013 = vmatpush1.bf16.msra.mxu0 0
        %2014 = vmatprep.subr.bf16.mxu0 0
        %2015 = vmatpush1.bf16.msra.mxu0 0
        %2016 = vmatprep.subr.bf16.mxu0 0
        %2017 = vmatpush1.bf16.msra.mxu0 0
        %2018 = vmatprep.mubr.bf16.mxu0 0
        %2019 = vmatmul.mubr.bf16.gmra.mrb[0].mxu0 %v1984
        %v2020 = vpop.f32.mrb[0].mxu0
        %v2021 = vadd.f32 %v1956, %v2020
        %v2022 = vpop.f32.mrb[0].mxu0
        %v2023 = vpop.f32.mrb[0].mxu0
        %v2024 = vpop.f32.mrb[0].mxu0
        %2025 = vdwg.mxu0
        %v2026 = vadd.f32 %v1873, %v2021
        %v2027 = vld [vmem:[%s12] sm:$0x1]
        %v2028 = vld [vmem:[%s13] sm:$0x1]
        %v2029 = vsel %vm985, %v2026, 0.0
        %2030 = vadd.xlane.f32.xlu0 %v2029
        %v2031 = vpop.xlane.xlu0 %2030
        %v2032 = vmul.f32 %v2031, %v1847
        %v2033 = vmul.f32 %v2026, %v2026
        %v2034 = vsel %vm985, %v2033, 0.0
        %2035 = vadd.xlane.f32.xlu0 %v2034
        %v2036 = vpop.xlane.xlu0 %2035
        %v2037 = vmul.f32 %v2036, %v1847
        %v2038 = vmul.f32 %v2032, %v2032
        %v2039 = vsub.f32 %v2037, %v2038
        %v2040 = vadd.f32 %v2039, 1e-06
        %v2041 = vrsqrt.pop %v2040
        %v2042 = vsub.f32 %v2026, %v2032
        %v2043 = vmul.f32 %v2042, %v2041
        %v2045 = vlaneseq
        %v2046 = vshrl.u32 %v2045, 7
        %v2047 = vsub.s32 0, %v2046
        %v2048 = vrot.slane %v2027, %v2047
        %v2050 = vmul.f32 %v2048, %v2043
        %v2052 = vlaneseq
        %v2053 = vshrl.u32 %v2052, 7
        %v2054 = vsub.s32 0, %v2053
        %v2055 = vrot.slane %v2028, %v2054
        %v2057 = vadd.f32 %v2050, %v2055
        %2058 = vst.msk [vmem:[%s472] sm:$0xff] %vm985, %v2057
        %s2059 = sand.u32 %s349, 1
        %s2060 = scalar_lea.sflag [#allocation5], %s2059
        %s2061 = sand.u32 %s349, 1
        %s2062 = smul.addr %s2061, 8
        %s2063 = scalar_lea.vmem [#allocation4], %s2062
        // Predicated region
        $region81: #{tpu_custom_call.1} parent=75 // pred_check
          %p2064 = pneg %p359
        $region82: #{tpu_custom_call.1} parent=75 // pred_check_branch
          %2066 = sbr.rel (%p2064) target = $region84
        $region83: #{tpu_custom_call.1} parent=75 // pred_region
          %s2068 = ssub.s32 128, 128
          %2069 = vsyncadd %s2060, %s2068
          %s2070 = sadd.s32 %s33, %s32
          %s2071 = smul.addr %s2070, 128
          %s2072 = scalar_lea.hbm %s14, %s2071
          %s2074 = sshll.u32 %s2063, 4
          %s2075 = int_to_ptr.vmem [resolvable:$true] %s2074
          %2077 = dma.vmem_to_hbm [thread:$0]  %s2075, 128, %s2072, %s2060
        $region84: #{tpu_custom_call.1} parent=75 // pred_fallthru
          _
      $region76: #{tpu_custom_call.1} parent=5 // pred_fallthru
        _
      %p2078 = scmp.le.s32.totalorder 2, %s23
      // Predicated region
      $region85: #{tpu_custom_call.1} parent=5 // pred_check
        %p2079 = pneg %p2078
      $region86: #{tpu_custom_call.1} parent=5 // pred_check_branch
        %2081 = sbr.rel (%p2079) target = $region88
      $region87: #{tpu_custom_call.1} parent=5 // pred_region
        %s2082 = ssub.s32 %s23, 2
        // Predicated region
        $region89: #{tpu_custom_call.1} parent=87 // pred_check
          %p2083 = pneg %p365
        $region90: #{tpu_custom_call.1} parent=87 // pred_check_branch
          %2085 = sbr.rel (%p2083) target = $region92
        $region91: #{tpu_custom_call.1} parent=87 // pred_region
          %s2086 = sand.u32 %s350, 1
          %s2087 = scalar_lea.sflag [#allocation5], %s2086
          %s2088 = sand.u32 %s350, 1
          %s2089 = smul.addr %s2088, 8
          %s2090 = scalar_lea.vmem [#allocation4], %s2089
          %2091 = dma.done %s2087, 128
        $region92: #{tpu_custom_call.1} parent=87 // pred_fallthru
          _
      $region88: #{tpu_custom_call.1} parent=5 // pred_fallthru
        _
    $region6: #{tpu_custom_call.1} parent=1 // loop_footer
      %s27 = sadd.s32 1, %s23
    $region7: #{tpu_custom_call.1} parent=1 // loop_footer_branch
      %22 = sbr.rel target = $region3
    $region8: #{tpu_custom_call.1} parent=1 // loop_exit
      _
    %2092 = vsyncpa [#allocation5], 1
    %s2093 = scalar_lea.sflag [#allocation5], 1
    %2094 = vsyncpa %s2093, 1

</llo_original>
